<compile_context>
chip_gen: v6e
topology: v6e:2x2x1
jax: 0.10.0
libtpu: 0.0.40
codegen_flags: <defaults>
</compile_context>

<pallas_src>
import functools

import jax
import jax.numpy as jnp
from jax.experimental import pallas as pl
from jax.experimental.pallas import tpu as pltpu


def _round_up(x, m):
    return (x + m - 1) // m * m


# ---------------------------------------------------------------------------
# Pallas kernel: one batch tile of CrossNet + DeepNet + final linear + sigmoid
# ---------------------------------------------------------------------------
def _dcn1_kernel(n_cross, n_deep, cross_on_mxu, *refs):
    # refs layout:
    #   x0_ref   (TB, D)          bf16/f32  batch tile (ragged last tile OK)
    #   wc_ref   (L, D, D) bf16 if cross_on_mxu else (L, D) f32   (resident)
    #   bc_ref   (L, D)           f32       stacked cross biases  (resident)
    #   (Wd_i, bd_i) * n_deep     bf16 (din, dout), f32 (1, dout) (resident)
    #   wfc_ref  (1, D)           f32       final-linear slice (cross part)
    #   wfd_ref  (1, H_last)      f32       final-linear slice (deep part)
    #   bf_ref   (1, 1)           f32       SMEM scalar
    #   out_ref  (TB, 1)          f32       per-row probabilities
    idx = 0
    x0_ref = refs[idx]; idx += 1
    wc_ref = refs[idx]; idx += 1
    bc_ref = refs[idx]; idx += 1
    deep_refs = []
    for _ in range(n_deep):
        deep_refs.append((refs[idx], refs[idx + 1]))
        idx += 2
    wfc_ref = refs[idx]; idx += 1
    wfd_ref = refs[idx]; idx += 1
    bf_ref = refs[idx]; idx += 1
    out_ref = refs[idx]

    x0_lp = x0_ref[...]                              # (TB, D), HBM dtype (bf16 in demo)
    x0 = x0_lp.astype(jnp.float32)                   # f32 working copy (upcast hidden under DMA)

    # ---- CrossNet: xi_next = x0 * (xi . w_l) + b_l + xi --------------------
    # CrossLayer: xi_next = (x0 xi^T) @ w + b + xi
    # ((x0 xi^T) @ w)[r, d] = x0[r, d] * (xi[r, :] . w)
    xi = x0
    for l in range(n_cross):                                       # static -> unrolled
        b_row = bc_ref[l:l + 1, :]                                 # (1, D) f32
        if cross_on_mxu:
            # rank-1 matmul on the MXU: every column of xw equals xi . w_l,
            # replacing both the XLU lane-reduce and the lane broadcast.
            wmat = wc_ref[l]                                       # (D, D) bf16
            xi_lp = x0_lp.astype(wmat.dtype) if l == 0 else xi.astype(wmat.dtype)
            xw = jnp.dot(xi_lp, wmat,
                         preferred_element_type=jnp.float32)       # (TB, D) f32
        else:
            # f32 VPU mul + XLU lane-reduce fallback
            w_row = wc_ref[l:l + 1, :]                             # (1, D) f32
            xw = jnp.sum(xi * w_row, axis=1, keepdims=True)        # (TB, 1)
        xi = x0 * xw + b_row + xi

    # ---- DeepNet (Linear + ReLU stack; bf16 MXU operands, f32 accumulate) --
    h = x0
    h_lp = x0_lp
    for (w_ref, b_ref) in deep_refs:
        w = w_ref[...]
        h = jnp.dot(h_lp.astype(w.dtype), w,
                    preferred_element_type=jnp.float32) + b_ref[...]
        h = jnp.maximum(h, 0.0)
        h_lp = h

    # ---- final linear over concat([xi, h]) + sigmoid ------------------------
    # f32 lane-reduces -> (TB, 1): no (1,K)x(TB,K)^T dot_general, so no hidden
    # full-tile transposes of xi / h; output traffic is only 4 B/row.
    logits = (jnp.sum(xi * wfc_ref[...], axis=1, keepdims=True)
              + jnp.sum(h * wfd_ref[...], axis=1, keepdims=True)
              + bf_ref[0, 0])                                      # SMEM scalar
    out_ref[...] = pl.reciprocal(1.0 + jnp.exp(-logits), approx=True)


# ---------------------------------------------------------------------------
# Wrapper: tiling + pallas_call (no padding / copying of the x0 stream)
# ---------------------------------------------------------------------------
def dcn1_pallas(x0, cross_w, cross_b, deep_params, wf_cross, wf_deep, bf,
                *, block_rows=8192, deep_dtype=jnp.bfloat16, cross_on_mxu=True):
    """Fused DCN1 head on a (B, D) input x0 (f32 or bf16).

    block_rows: batch tile size (rounded to a multiple of 128).  At the
    default 8192 the double-buffered x0 tiles are <2 MiB even in f32, well
    inside the scoped-VMEM defaults of v5e/v6e/v7x -> no vmem_limit override.
    """
    B, D = x0.shape
    n_cross = cross_w.shape[0]
    n_deep = len(deep_params)
    f32 = jnp.float32

    TB = _round_up(min(block_rows, _round_up(B, 128)), 128)
    G = pl.cdiv(B, TB)                       # ragged last tile; no batch padding

    # ---- small weights (all VMEM-resident via constant index maps) ---------
    if cross_on_mxu:
        # rank-1 matrices W_l = outer(w_l, ones(D)), bf16 for the MXU
        wc_in = (cross_w.astype(deep_dtype)[:, :, None]
                 * jnp.ones((1, 1, D), deep_dtype))                # (L, D, D)
        wc_spec = pl.BlockSpec((n_cross, D, D), lambda g: (0, 0, 0))
    else:
        wc_in = cross_w.astype(f32)                                # (L, D)
        wc_spec = pl.BlockSpec((n_cross, D), lambda g: (0, 0))
    bc_in = cross_b.astype(f32)                                    # (L, D)

    deep_inputs, deep_specs = [], []
    d_in = D
    for (W, b) in deep_params:
        d_out = W.shape[1]
        deep_inputs += [W.astype(deep_dtype), b.astype(f32).reshape(1, d_out)]
        deep_specs += [pl.BlockSpec((d_in, d_out), lambda g: (0, 0)),
                       pl.BlockSpec((1, d_out), lambda g: (0, 0))]
        d_in = d_out
    h_last = d_in

    wfc_in = wf_cross.astype(f32).reshape(1, D)
    wfd_in = wf_deep.astype(f32).reshape(1, h_last)
    bf_in = jnp.asarray(bf, f32).reshape(1, 1)

    inputs = [x0, wc_in, bc_in] + deep_inputs + [wfc_in, wfd_in, bf_in]
    in_specs = (
        [pl.BlockSpec((TB, D), lambda g: (g, 0)),      # unpadded x0 batch stream
         wc_spec,
         pl.BlockSpec((n_cross, D), lambda g: (0, 0))]
        + deep_specs
        + [pl.BlockSpec((1, D), lambda g: (0, 0)),
           pl.BlockSpec((1, h_last), lambda g: (0, 0)),
           pl.BlockSpec(memory_space=pltpu.MemorySpace.SMEM)]   # scalar bias in SMEM
    )
    out_specs = pl.BlockSpec((TB, 1), lambda g: (g, 0))

    kernel = functools.partial(_dcn1_kernel, n_cross, n_deep, cross_on_mxu)
    out = pl.pallas_call(
        kernel,
        out_shape=jax.ShapeDtypeStruct((G * TB, 1), f32),
        grid=(G,),
        in_specs=in_specs,
        out_specs=out_specs,
        compiler_params=pltpu.CompilerParams(
            # TODO(synk): on v7x verify with a per-core trace that the batch
            # axis shards across both TensorCores; if one TC sits idle, switch
            # this axis to pltpu.CORE_PARALLEL (weights stay resident per core).
            dimension_semantics=("parallel",),
        ),
    )(*inputs)

    # rows >= B come from the ragged last tile's out-of-bounds region.
    return out[:B]


# ---------------------------------------------------------------------------
# Embedding layer glue (plain JAX)
# ---------------------------------------------------------------------------
# TODO(synk): EmbeddingLayer source was not provided; implemented as standard
# one-hot lookup + multi-hot sum-pooling with concatenation (cat_emb=True).
def embedding_layer(one_hot_x, multi_hot_x, one_hot_tables, multi_hot_tables):
    embs = []
    for i, table in enumerate(one_hot_tables):
        embs.append(table[one_hot_x[:, i]])            # (B, emb_dim) gather
    for i, table in enumerate(multi_hot_tables):
        embs.append(multi_hot_x[i] @ table)             # sum-pooled multi-hot embedding
    return jnp.concatenate(embs, axis=1)


# ---------------------------------------------------------------------------
# Pure-JAX reference (for correctness check)
# ---------------------------------------------------------------------------
def dcn1_reference(x0, cross_w, cross_b, deep_params, wf_cross, wf_deep, bf,
                   *, cross_dtype=None, deep_dtype=None):
    x0f = x0.astype(jnp.float32)
    xi = x0f
    for l in range(cross_w.shape[0]):
        if cross_dtype is not None:
            xw = jnp.dot(xi.astype(cross_dtype),
                         cross_w[l].astype(cross_dtype)[:, None],
                         preferred_element_type=jnp.float32)       # (B, 1)
        else:
            xw = jnp.sum(xi * cross_w[l][None, :], axis=1, keepdims=True)
        xi = x0f * xw + cross_b[l][None, :] + xi
    h = x0f
    for W, b in deep_params:
        if deep_dtype is not None:
            h = jnp.dot(h.astype(deep_dtype), W.astype(deep_dtype),
                        preferred_element_type=jnp.float32) + b
        else:
            h = h @ W + b
        h = jnp.maximum(h, 0.0)
    logits = xi @ wf_cross + h @ wf_deep + bf
    return jax.nn.sigmoid(logits)


if __name__ == "__main__":
    key = jax.random.PRNGKey(0)

    # ---- model config (small, consistent with the module) ----
    B = 300                      # spans multiple 128-row batch tiles + a ragged tail
    dense_dim = 16
    one_hot_fea_list = [10, 20]  # vocab sizes
    one_hot_fea_emb_dim = 8
    multi_hot_fea_list = [12]    # vocab sizes
    multi_hot_fea_emb_dim = 8
    in_dim = dense_dim + len(one_hot_fea_list) * one_hot_fea_emb_dim \
        + len(multi_hot_fea_list) * multi_hot_fea_emb_dim   # = 40
    cross_order = 3
    hidden_dims = [32, 16]

    keys = iter(jax.random.split(key, 32))

    # ---- deterministic parameters ----
    one_hot_tables = [
        jax.random.normal(next(keys), (v, one_hot_fea_emb_dim), jnp.float32) * 0.1
        for v in one_hot_fea_list
    ]
    multi_hot_tables = [
        jax.random.normal(next(keys), (v, multi_hot_fea_emb_dim), jnp.float32) * 0.1
        for v in multi_hot_fea_list
    ]

    # CrossLayer: w xavier-uniform, b zeros (matches nn.init in the module)
    xav = (6.0 / (in_dim + 1)) ** 0.5
    cross_w = jax.random.uniform(next(keys), (cross_order, in_dim), jnp.float32,
                                 minval=-xav, maxval=xav)
    cross_b = jnp.zeros((cross_order, in_dim), jnp.float32)

    # DeepNet: Linear(in, h) + ReLU per hidden dim, weights stored (in, out)
    deep_params = []
    d_in = in_dim
    for h_dim in hidden_dims:
        W = jax.random.normal(next(keys), (d_in, h_dim), jnp.float32) * (1.0 / d_in ** 0.5)
        b = jax.random.normal(next(keys), (1, h_dim), jnp.float32) * 0.01
        deep_params.append((W, b))
        d_in = h_dim

    # final Linear(in_dim + hidden_dims[-1], 1), split along the concat axis
    last_dim = in_dim + hidden_dims[-1]
    wf_full = jax.random.normal(next(keys), (last_dim, 1), jnp.float32) * (1.0 / last_dim ** 0.5)
    wf_cross = wf_full[:in_dim]
    wf_deep = wf_full[in_dim:]
    bf = jax.random.normal(next(keys), (1, 1), jnp.float32) * 0.01

    # ---- deterministic example inputs ----
    dense_x = jax.random.normal(next(keys), (B, dense_dim), jnp.float32)
    one_hot_x = jnp.stack(
        [jax.random.randint(next(keys), (B,), 0, v) for v in one_hot_fea_list], axis=1
    )                                                               # (B, 2) int32
    multi_hot_x = [
        jax.random.bernoulli(next(keys), 0.3, (B, v)).astype(jnp.float32)
        for v in multi_hot_fea_list
    ]                                                               # [(B, 12)]

    # ---- forward ----
    emb_x = embedding_layer(one_hot_x, multi_hot_x, one_hot_tables, multi_hot_tables)
    x0_f32 = jnp.concatenate([dense_x, emb_x], axis=1)              # (B, in_dim) f32
    # In production the embedding/concat producer would emit bf16 directly;
    # here we cast once to demonstrate the halved HBM stream into the kernel.
    x0_bf16 = x0_f32.astype(jnp.bfloat16)

    # small block_rows so this tiny test exercises a multi-step grid with a
    # ragged last tile (300 = 2*128 + 44)
    out = dcn1_pallas(x0_bf16, cross_w, cross_b, deep_params, wf_cross, wf_deep, bf,
                      block_rows=128, deep_dtype=jnp.bfloat16, cross_on_mxu=True)
    out = jax.block_until_ready(out)

    # numerics-matched reference (bf16 x0, bf16 cross dot, bf16 deep matmuls)
    ref_match = dcn1_reference(x0_bf16, cross_w, cross_b, deep_params,
                               wf_cross, wf_deep, bf,
                               cross_dtype=jnp.bfloat16, deep_dtype=jnp.bfloat16)
    # full-f32 reference (original module semantics), loose tolerance by design
    ref_f32 = dcn1_reference(x0_f32, cross_w, cross_b, deep_params,
                             wf_cross, wf_deep, bf)

    assert out.shape == (B, 1)
    assert bool(jnp.all(jnp.isfinite(out)))
    assert jnp.allclose(out, ref_match, atol=2e-3, rtol=2e-3), \
        "mismatch vs bf16-matched reference"
    assert float(jnp.max(jnp.abs(out - ref_f32))) < 0.1, \
        "mismatch vs f32 reference (loose: bf16 input + bf16 matmuls)"

    # also check the VPU/XLU f32 cross fallback with the default (single) tile
    out2 = dcn1_pallas(x0_bf16, cross_w, cross_b, deep_params, wf_cross, wf_deep, bf,
                       deep_dtype=jnp.bfloat16, cross_on_mxu=False)
    out2 = jax.block_until_ready(out2)
    ref_match2 = dcn1_reference(x0_bf16, cross_w, cross_b, deep_params,
                                wf_cross, wf_deep, bf,
                                cross_dtype=None, deep_dtype=jnp.bfloat16)
    assert jnp.allclose(out2, ref_match2, atol=2e-3, rtol=2e-3), \
        "fallback path mismatch vs matched reference"

    print("KERNEL_OK")
</pallas_src>

<mosaic_0001>
module attributes {stable_mosaic.version = 11 : i64} {
  func.func @_dcn1_kernel(%arg0: i32, %arg1: memref<128x40xbf16, #tpu.memory_space<vmem>>, %arg2: memref<3x40x40xbf16, #tpu.memory_space<vmem>>, %arg3: memref<3x40xf32, #tpu.memory_space<vmem>>, %arg4: memref<40x32xbf16, #tpu.memory_space<vmem>>, %arg5: memref<1x32xf32, #tpu.memory_space<vmem>>, %arg6: memref<32x16xbf16, #tpu.memory_space<vmem>>, %arg7: memref<1x16xf32, #tpu.memory_space<vmem>>, %arg8: memref<1x40xf32, #tpu.memory_space<vmem>>, %arg9: memref<1x16xf32, #tpu.memory_space<vmem>>, %arg10: memref<1x1xf32, #tpu.memory_space<smem>>, %arg11: memref<128x1xf32, #tpu.memory_space<vmem>>) attributes {dimension_semantics = [#tpu.dimension_semantics<parallel>], iteration_bounds = array<i64: 3>, scalar_prefetch = 0 : i64, scratch_operands = 0 : i64, tpu.core_type = #tpu.core_type<tc>, window_params = [{transform_indices = @transform_0, window_bounds = array<i64: 128, 40>}, {pipeline_mode = #tpu.pipeline_mode<synchronous>, transform_indices = @transform_1, window_bounds = array<i64: 3, 40, 40>}, {pipeline_mode = #tpu.pipeline_mode<synchronous>, transform_indices = @transform_2, window_bounds = array<i64: 3, 40>}, {pipeline_mode = #tpu.pipeline_mode<synchronous>, transform_indices = @transform_3, window_bounds = array<i64: 40, 32>}, {pipeline_mode = #tpu.pipeline_mode<synchronous>, transform_indices = @transform_4, window_bounds = array<i64: 1, 32>}, {pipeline_mode = #tpu.pipeline_mode<synchronous>, transform_indices = @transform_5, window_bounds = array<i64: 32, 16>}, {pipeline_mode = #tpu.pipeline_mode<synchronous>, transform_indices = @transform_6, window_bounds = array<i64: 1, 16>}, {pipeline_mode = #tpu.pipeline_mode<synchronous>, transform_indices = @transform_7, window_bounds = array<i64: 1, 40>}, {pipeline_mode = #tpu.pipeline_mode<synchronous>, transform_indices = @transform_8, window_bounds = array<i64: 1, 16>}, {transform_indices = @transform_9, window_bounds = array<i64: 1, 1>}, {transform_indices = @transform_10, window_bounds = array<i64: 128, 1>}]} {
    %c0 = arith.constant 0 : index
    %c0_0 = arith.constant 0 : index
    %0 = vector.load %arg1[%c0, %c0_0] : memref<128x40xbf16, #tpu.memory_space<vmem>>, vector<128x40xbf16>
    %1 = arith.extf %0 : vector<128x40xbf16> to vector<128x40xf32>
    %c0_1 = arith.constant 0 : index
    %c0_2 = arith.constant 0 : index
    %2 = vector.load %arg3[%c0_1, %c0_2] : memref<3x40xf32, #tpu.memory_space<vmem>>, vector<1x40xf32>
    %c0_3 = arith.constant 0 : index
    %c0_4 = arith.constant 0 : index
    %c0_5 = arith.constant 0 : index
    %3 = vector.load %arg2[%c0_3, %c0_4, %c0_5] : memref<3x40x40xbf16, #tpu.memory_space<vmem>>, vector<1x40x40xbf16>
    %4 = vector.shape_cast %3 : vector<1x40x40xbf16> to vector<40x40xbf16>
    %cst = arith.constant dense<0.000000e+00> : vector<128x40xf32>
    %5 = tpu.matmul %0, %4, %cst {dimension_numbers = #tpu.dot_dimension_numbers<[1], [0], [0], [1], [0, 0, 1, 1], [], []>} : vector<128x40xbf16>, vector<40x40xbf16>, vector<128x40xf32> -> vector<128x40xf32>
    %6 = arith.mulf %1, %5 : vector<128x40xf32>
    %7 = vector.broadcast %2 : vector<1x40xf32> to vector<128x40xf32>
    %8 = arith.addf %6, %7 : vector<128x40xf32>
    %9 = arith.addf %8, %1 : vector<128x40xf32>
    %c1 = arith.constant 1 : index
    %c0_6 = arith.constant 0 : index
    %10 = vector.load %arg3[%c1, %c0_6] : memref<3x40xf32, #tpu.memory_space<vmem>>, vector<1x40xf32>
    %c1_7 = arith.constant 1 : index
    %c0_8 = arith.constant 0 : index
    %c0_9 = arith.constant 0 : index
    %11 = vector.load %arg2[%c1_7, %c0_8, %c0_9] : memref<3x40x40xbf16, #tpu.memory_space<vmem>>, vector<1x40x40xbf16>
    %12 = vector.shape_cast %11 : vector<1x40x40xbf16> to vector<40x40xbf16>
    %13 = arith.truncf %9 : vector<128x40xf32> to vector<128x40xbf16>
    %cst_10 = arith.constant dense<0.000000e+00> : vector<128x40xf32>
    %14 = tpu.matmul %13, %12, %cst_10 {dimension_numbers = #tpu.dot_dimension_numbers<[1], [0], [0], [1], [0, 0, 1, 1], [], []>} : vector<128x40xbf16>, vector<40x40xbf16>, vector<128x40xf32> -> vector<128x40xf32>
    %15 = arith.mulf %1, %14 : vector<128x40xf32>
    %16 = vector.broadcast %10 : vector<1x40xf32> to vector<128x40xf32>
    %17 = arith.addf %15, %16 : vector<128x40xf32>
    %18 = arith.addf %17, %9 : vector<128x40xf32>
    %c2 = arith.constant 2 : index
    %c0_11 = arith.constant 0 : index
    %19 = vector.load %arg3[%c2, %c0_11] : memref<3x40xf32, #tpu.memory_space<vmem>>, vector<1x40xf32>
    %c2_12 = arith.constant 2 : index
    %c0_13 = arith.constant 0 : index
    %c0_14 = arith.constant 0 : index
    %20 = vector.load %arg2[%c2_12, %c0_13, %c0_14] : memref<3x40x40xbf16, #tpu.memory_space<vmem>>, vector<1x40x40xbf16>
    %21 = vector.shape_cast %20 : vector<1x40x40xbf16> to vector<40x40xbf16>
    %22 = arith.truncf %18 : vector<128x40xf32> to vector<128x40xbf16>
    %cst_15 = arith.constant dense<0.000000e+00> : vector<128x40xf32>
    %23 = tpu.matmul %22, %21, %cst_15 {dimension_numbers = #tpu.dot_dimension_numbers<[1], [0], [0], [1], [0, 0, 1, 1], [], []>} : vector<128x40xbf16>, vector<40x40xbf16>, vector<128x40xf32> -> vector<128x40xf32>
    %24 = arith.mulf %1, %23 : vector<128x40xf32>
    %25 = vector.broadcast %19 : vector<1x40xf32> to vector<128x40xf32>
    %26 = arith.addf %24, %25 : vector<128x40xf32>
    %27 = arith.addf %26, %18 : vector<128x40xf32>
    %c0_16 = arith.constant 0 : index
    %c0_17 = arith.constant 0 : index
    %28 = vector.load %arg4[%c0_16, %c0_17] : memref<40x32xbf16, #tpu.memory_space<vmem>>, vector<40x32xbf16>
    %cst_18 = arith.constant dense<0.000000e+00> : vector<128x32xf32>
    %29 = tpu.matmul %0, %28, %cst_18 {dimension_numbers = #tpu.dot_dimension_numbers<[1], [0], [0], [1], [0, 0, 1, 1], [], []>} : vector<128x40xbf16>, vector<40x32xbf16>, vector<128x32xf32> -> vector<128x32xf32>
    %c0_19 = arith.constant 0 : index
    %c0_20 = arith.constant 0 : index
    %30 = vector.load %arg5[%c0_19, %c0_20] : memref<1x32xf32, #tpu.memory_space<vmem>>, vector<1x32xf32>
    %31 = vector.broadcast %30 : vector<1x32xf32> to vector<128x32xf32>
    %32 = arith.addf %29, %31 : vector<128x32xf32>
    %cst_21 = arith.constant 0.000000e+00 : f32
    %33 = vector.broadcast %cst_21 : f32 to vector<128x32xf32>
    %34 = arith.maximumf %32, %33 : vector<128x32xf32>
    %c0_22 = arith.constant 0 : index
    %c0_23 = arith.constant 0 : index
    %35 = vector.load %arg6[%c0_22, %c0_23] : memref<32x16xbf16, #tpu.memory_space<vmem>>, vector<32x16xbf16>
    %36 = arith.truncf %34 : vector<128x32xf32> to vector<128x32xbf16>
    %cst_24 = arith.constant dense<0.000000e+00> : vector<128x16xf32>
    %37 = tpu.matmul %36, %35, %cst_24 {dimension_numbers = #tpu.dot_dimension_numbers<[1], [0], [0], [1], [0, 0, 1, 1], [], []>} : vector<128x32xbf16>, vector<32x16xbf16>, vector<128x16xf32> -> vector<128x16xf32>
    %c0_25 = arith.constant 0 : index
    %c0_26 = arith.constant 0 : index
    %38 = vector.load %arg7[%c0_25, %c0_26] : memref<1x16xf32, #tpu.memory_space<vmem>>, vector<1x16xf32>
    %39 = vector.broadcast %38 : vector<1x16xf32> to vector<128x16xf32>
    %40 = arith.addf %37, %39 : vector<128x16xf32>
    %cst_27 = arith.constant 0.000000e+00 : f32
    %41 = vector.broadcast %cst_27 : f32 to vector<128x16xf32>
    %42 = arith.maximumf %40, %41 : vector<128x16xf32>
    %c0_28 = arith.constant 0 : index
    %c0_29 = arith.constant 0 : index
    %43 = vector.load %arg8[%c0_28, %c0_29] : memref<1x40xf32, #tpu.memory_space<vmem>>, vector<1x40xf32>
    %44 = vector.broadcast %43 : vector<1x40xf32> to vector<128x40xf32>
    %45 = arith.mulf %27, %44 : vector<128x40xf32>
    %cst_30 = arith.constant dense<0.000000e+00> : vector<128xf32>
    %46 = vector.multi_reduction <add>, %45, %cst_30 [1] : vector<128x40xf32> to vector<128xf32>
    %47 = vector.shape_cast %46 : vector<128xf32> to vector<128x1xf32>
    %c0_31 = arith.constant 0 : index
    %c0_32 = arith.constant 0 : index
    %48 = vector.load %arg9[%c0_31, %c0_32] : memref<1x16xf32, #tpu.memory_space<vmem>>, vector<1x16xf32>
    %49 = vector.broadcast %48 : vector<1x16xf32> to vector<128x16xf32>
    %50 = arith.mulf %42, %49 : vector<128x16xf32>
    %cst_33 = arith.constant dense<0.000000e+00> : vector<128xf32>
    %51 = vector.multi_reduction <add>, %50, %cst_33 [1] : vector<128x16xf32> to vector<128xf32>
    %52 = vector.shape_cast %51 : vector<128xf32> to vector<128x1xf32>
    %53 = arith.addf %47, %52 : vector<128x1xf32>
    %c0_34 = arith.constant 0 : index
    %c0_35 = arith.constant 0 : index
    %54 = memref.load %arg10[%c0_34, %c0_35] : memref<1x1xf32, #tpu.memory_space<smem>>
    %55 = vector.broadcast %54 : f32 to vector<128x1xf32>
    %56 = arith.addf %53, %55 : vector<128x1xf32>
    %cst_36 = arith.constant 0.000000e+00 : f32
    %57 = vector.broadcast %cst_36 : f32 to vector<128x1xf32>
    %58 = arith.subf %57, %56 : vector<128x1xf32>
    %59 = math.exp %58 : vector<128x1xf32>
    %cst_37 = arith.constant 1.000000e+00 : f32
    %60 = vector.broadcast %cst_37 : f32 to vector<128x1xf32>
    %61 = arith.addf %60, %59 : vector<128x1xf32>
    %62 = tpu.reciprocal %61 {approx = true} : vector<128x1xf32> -> vector<128x1xf32>
    %c0_38 = arith.constant 0 : index
    %c0_39 = arith.constant 0 : index
    %63 = vector.load %arg11[%c0_38, %c0_39] : memref<128x1xf32, #tpu.memory_space<vmem>>, vector<128x1xf32>
    tpu.vector_store %arg11[%c0_38, %c0_39], %62 {strides = array<i32>} : memref<128x1xf32, #tpu.memory_space<vmem>>, vector<128x1xf32>,
    return
  }
  func.func @transform_0(%arg0: i32) -> (i32, i32) {
    %c0_i32 = arith.constant 0 : i32
    %c0_i32_0 = arith.constant 0 : i32
    return %arg0, %c0_i32 : i32, i32
  }
  func.func @transform_1(%arg0: i32) -> (i32, i32, i32) {
    %c0_i32 = arith.constant 0 : i32
    %c0_i32_0 = arith.constant 0 : i32
    %c0_i32_1 = arith.constant 0 : i32
    %c0_i32_2 = arith.constant 0 : i32
    return %c0_i32, %c0_i32_0, %c0_i32_1 : i32, i32, i32
  }
  func.func @transform_2(%arg0: i32) -> (i32, i32) {
    %c0_i32 = arith.constant 0 : i32
    %c0_i32_0 = arith.constant 0 : i32
    %c0_i32_1 = arith.constant 0 : i32
    return %c0_i32, %c0_i32_0 : i32, i32
  }
  func.func @transform_3(%arg0: i32) -> (i32, i32) {
    %c0_i32 = arith.constant 0 : i32
    %c0_i32_0 = arith.constant 0 : i32
    %c0_i32_1 = arith.constant 0 : i32
    return %c0_i32, %c0_i32_0 : i32, i32
  }
  func.func @transform_4(%arg0: i32) -> (i32, i32) {
    %c0_i32 = arith.constant 0 : i32
    %c0_i32_0 = arith.constant 0 : i32
    %c0_i32_1 = arith.constant 0 : i32
    return %c0_i32, %c0_i32_0 : i32, i32
  }
  func.func @transform_5(%arg0: i32) -> (i32, i32) {
    %c0_i32 = arith.constant 0 : i32
    %c0_i32_0 = arith.constant 0 : i32
    %c0_i32_1 = arith.constant 0 : i32
    return %c0_i32, %c0_i32_0 : i32, i32
  }
  func.func @transform_6(%arg0: i32) -> (i32, i32) {
    %c0_i32 = arith.constant 0 : i32
    %c0_i32_0 = arith.constant 0 : i32
    %c0_i32_1 = arith.constant 0 : i32
    return %c0_i32, %c0_i32_0 : i32, i32
  }
  func.func @transform_7(%arg0: i32) -> (i32, i32) {
    %c0_i32 = arith.constant 0 : i32
    %c0_i32_0 = arith.constant 0 : i32
    %c0_i32_1 = arith.constant 0 : i32
    return %c0_i32, %c0_i32_0 : i32, i32
  }
  func.func @transform_8(%arg0: i32) -> (i32, i32) {
    %c0_i32 = arith.constant 0 : i32
    %c0_i32_0 = arith.constant 0 : i32
    %c0_i32_1 = arith.constant 0 : i32
    return %c0_i32, %c0_i32_0 : i32, i32
  }
  func.func @transform_9(%arg0: i32) -> (i32, i32) {
    %c0_i32 = arith.constant 0 : i32
    %c0_i32_0 = arith.constant 0 : i32
    %c0_i32_1 = arith.constant 0 : i32
    return %c0_i32, %c0_i32_0 : i32, i32
  }
  func.func @transform_10(%arg0: i32) -> (i32, i32) {
    %c0_i32 = arith.constant 0 : i32
    %c0_i32_0 = arith.constant 0 : i32
    return %arg0, %c0_i32 : i32, i32
  }
}

</mosaic_0001>

<llo_original>
// kernel: tpu_custom_call.1
$region0: #{tpu_custom_call.1}
  #allocation0 [shape = 'u32[]', space=smem, size = 0x4, offset = 0x4, fixed_abs, tag = 'smem constant byte address 0x4 - core index']
  #allocation1 [shape = 'u32[144,128]{1,0:T(1,128)}', space=vmem, size = 0x12000, scoped, tag = 'internal scratch']
  #allocation2 [shape = 'f32[1,1]{1,0:T(1,128)S(6)}', space=smem, size = 0x200, scoped, tag = 'scoped memory for tpu_custom_call.1']
  %s0 = inlined_call_operand.vmem [shape: bf16[300,40], index: 0, kind: input, shape index: {}]
  %s1 = inlined_call_operand.vmem [shape: bf16[3,40,40], index: 1, kind: input, shape index: {}]
  %s2 = inlined_call_operand.vmem [shape: f32[3,40], index: 2, kind: input, shape index: {}]
  %s3 = inlined_call_operand.vmem [shape: bf16[40,32], index: 3, kind: input, shape index: {}]
  %s4 = inlined_call_operand.vmem [shape: f32[1,32], index: 4, kind: input, shape index: {}]
  %s5 = inlined_call_operand.vmem [shape: bf16[32,16], index: 5, kind: input, shape index: {}]
  %s6 = inlined_call_operand.vmem [shape: f32[1,16], index: 6, kind: input, shape index: {}]
  %s7 = inlined_call_operand.vmem [shape: f32[1,40], index: 7, kind: input, shape index: {}]
  %s8 = inlined_call_operand.vmem [shape: f32[1,16], index: 8, kind: input, shape index: {}]
  %s9 = inlined_call_operand.<no memory space> [shape: f32[1,1], index: 9, kind: input, shape index: {}]
  %s10 = inlined_call_operand.vmem [shape: f32[384,1], index: 10, kind: output, shape index: {}]
  %s11 = sld [smem:[#allocation0]]
  $region73: #{tpu_custom_call.1} parent=0
    _
  %s13 = ssub.s32 1, %s11
  %s14 = scalar_select 0, %s13, %s11
  %15 = sst [smem:[#allocation2]] %s9
  loop: start=0, step=1, limit=5
  $region2: #{tpu_custom_call.1} parent=0 // loop_pre_header
    _
  $region3: #{tpu_custom_call.1} parent=0 // loop_header
    %s17 = sphi 0, %s21
    %p18 = scmp.ge.s32.totalorder %s17, 5
    %s27 = sphi 0, %s29
    %s30 = sphi 0, %s27
    %s31 = sphi 0, %s30
    %s47 = sphi 0, %s31
    %s51 = sphi 0, %s51
    %s53 = sphi 0, %s51
    %s54 = sphi 0, %s53
    %s68 = sphi 0, %s54
    %s72 = sphi 0, %s72
    %s74 = sphi 0, %s72
    %s75 = sphi 0, %s74
    %s89 = sphi 0, %s75
    %s93 = sphi 0, %s93
    %s95 = sphi 0, %s93
    %s96 = sphi 0, %s95
    %s110 = sphi 0, %s96
    %s114 = sphi 0, %s114
    %s116 = sphi 0, %s114
    %s117 = sphi 0, %s116
    %s131 = sphi 0, %s117
    %s135 = sphi 0, %s135
    %s137 = sphi 0, %s135
    %s138 = sphi 0, %s137
    %s152 = sphi 0, %s138
    %s156 = sphi 0, %s156
    %s158 = sphi 0, %s156
    %s159 = sphi 0, %s158
    %s173 = sphi 0, %s159
    %s177 = sphi 0, %s177
    %s179 = sphi 0, %s177
    %s180 = sphi 0, %s179
    %s194 = sphi 0, %s180
    %s198 = sphi 0, %s198
    %s200 = sphi 0, %s198
    %s201 = sphi 0, %s200
    %s215 = sphi 0, %s201
    %s219 = sphi 0, %s219
    %s221 = sphi 0, %s219
    %s222 = sphi 0, %s221
    %s236 = sphi 0, %s222
    %s242 = sphi 0, %s244
    %s245 = sphi 0, %s242
    %s246 = sphi 0, %s245
    %s262 = sphi 0, %s246
  $region4: #{tpu_custom_call.1} parent=0 // loop_header_branch
    %20 = sbr.rel (%p18) target = $region8
  $region5: #{tpu_custom_call.1} parent=0 // loop_body
    %s22 = ssub.s32 %s17, 1
    %s23 = ssub.s32 %s17, 2
    %s24 = sadd.s32 %s17, 1
    %s25 = ssub.s32 %s17, %s24
    %p26 = scmp.eq.s32.totalorder %s25, 0
    %s28 = sadd.s32 %s27, 1
    %s29 = scalar_select %p26, %s27, %s28
    %p32 = pneg %p26
    %p33 = scmp.eq.s32.totalorder %s17, 2
    %p34 = por %p32, %p33
    %p35 = scmp.ne.s32.totalorder %s27, %s30
    %p36 = scmp.eq.s32.totalorder %s17, 0
    %p37 = por %p35, %p36
    %p38 = scmp.ne.s32.totalorder %s27, %s30
    %p39 = scmp.eq.s32.totalorder %s22, 2
    %p40 = por %p38, %p39
    %p41 = scmp.ne.s32.totalorder %s30, %s31
    %p42 = scmp.eq.s32.totalorder %s22, 0
    %p43 = por %p41, %p42
    %p44 = scmp.ne.s32.totalorder %s30, %s31
    %p45 = scmp.eq.s32.totalorder %s23, 2
    %p46 = por %p44, %p45
    %p48 = scmp.ne.s32.totalorder %s31, %s47
    %p49 = scmp.eq.s32.totalorder %s23, 0
    %p50 = por %p48, %p49
    %s52 = sadd.s32 %s51, 1
    %p55 = scmp.eq.s32.totalorder %s17, 2
    %p56 = scmp.ne.s32.totalorder %s51, %s53
    %p57 = scmp.eq.s32.totalorder %s17, 0
    %p58 = por %p56, %p57
    %p59 = scmp.ne.s32.totalorder %s51, %s53
    %p60 = scmp.eq.s32.totalorder %s22, 2
    %p61 = por %p59, %p60
    %p62 = scmp.ne.s32.totalorder %s53, %s54
    %p63 = scmp.eq.s32.totalorder %s22, 0
    %p64 = por %p62, %p63
    %p65 = scmp.ne.s32.totalorder %s53, %s54
    %p66 = scmp.eq.s32.totalorder %s23, 2
    %p67 = por %p65, %p66
    %p69 = scmp.ne.s32.totalorder %s54, %s68
    %p70 = scmp.eq.s32.totalorder %s23, 0
    %p71 = por %p69, %p70
    %s73 = sadd.s32 %s72, 1
    %p76 = scmp.eq.s32.totalorder %s17, 2
    %p77 = scmp.ne.s32.totalorder %s72, %s74
    %p78 = scmp.eq.s32.totalorder %s17, 0
    %p79 = por %p77, %p78
    %p80 = scmp.ne.s32.totalorder %s72, %s74
    %p81 = scmp.eq.s32.totalorder %s22, 2
    %p82 = por %p80, %p81
    %p83 = scmp.ne.s32.totalorder %s74, %s75
    %p84 = scmp.eq.s32.totalorder %s22, 0
    %p85 = por %p83, %p84
    %p86 = scmp.ne.s32.totalorder %s74, %s75
    %p87 = scmp.eq.s32.totalorder %s23, 2
    %p88 = por %p86, %p87
    %p90 = scmp.ne.s32.totalorder %s75, %s89
    %p91 = scmp.eq.s32.totalorder %s23, 0
    %p92 = por %p90, %p91
    %s94 = sadd.s32 %s93, 1
    %p97 = scmp.eq.s32.totalorder %s17, 2
    %p98 = scmp.ne.s32.totalorder %s93, %s95
    %p99 = scmp.eq.s32.totalorder %s17, 0
    %p100 = por %p98, %p99
    %p101 = scmp.ne.s32.totalorder %s93, %s95
    %p102 = scmp.eq.s32.totalorder %s22, 2
    %p103 = por %p101, %p102
    %p104 = scmp.ne.s32.totalorder %s95, %s96
    %p105 = scmp.eq.s32.totalorder %s22, 0
    %p106 = por %p104, %p105
    %p107 = scmp.ne.s32.totalorder %s95, %s96
    %p108 = scmp.eq.s32.totalorder %s23, 2
    %p109 = por %p107, %p108
    %p111 = scmp.ne.s32.totalorder %s96, %s110
    %p112 = scmp.eq.s32.totalorder %s23, 0
    %p113 = por %p111, %p112
    %s115 = sadd.s32 %s114, 1
    %p118 = scmp.eq.s32.totalorder %s17, 2
    %p119 = scmp.ne.s32.totalorder %s114, %s116
    %p120 = scmp.eq.s32.totalorder %s17, 0
    %p121 = por %p119, %p120
    %p122 = scmp.ne.s32.totalorder %s114, %s116
    %p123 = scmp.eq.s32.totalorder %s22, 2
    %p124 = por %p122, %p123
    %p125 = scmp.ne.s32.totalorder %s116, %s117
    %p126 = scmp.eq.s32.totalorder %s22, 0
    %p127 = por %p125, %p126
    %p128 = scmp.ne.s32.totalorder %s116, %s117
    %p129 = scmp.eq.s32.totalorder %s23, 2
    %p130 = por %p128, %p129
    %p132 = scmp.ne.s32.totalorder %s117, %s131
    %p133 = scmp.eq.s32.totalorder %s23, 0
    %p134 = por %p132, %p133
    %s136 = sadd.s32 %s135, 1
    %p139 = scmp.eq.s32.totalorder %s17, 2
    %p140 = scmp.ne.s32.totalorder %s135, %s137
    %p141 = scmp.eq.s32.totalorder %s17, 0
    %p142 = por %p140, %p141
    %p143 = scmp.ne.s32.totalorder %s135, %s137
    %p144 = scmp.eq.s32.totalorder %s22, 2
    %p145 = por %p143, %p144
    %p146 = scmp.ne.s32.totalorder %s137, %s138
    %p147 = scmp.eq.s32.totalorder %s22, 0
    %p148 = por %p146, %p147
    %p149 = scmp.ne.s32.totalorder %s137, %s138
    %p150 = scmp.eq.s32.totalorder %s23, 2
    %p151 = por %p149, %p150
    %p153 = scmp.ne.s32.totalorder %s138, %s152
    %p154 = scmp.eq.s32.totalorder %s23, 0
    %p155 = por %p153, %p154
    %s157 = sadd.s32 %s156, 1
    %p160 = scmp.eq.s32.totalorder %s17, 2
    %p161 = scmp.ne.s32.totalorder %s156, %s158
    %p162 = scmp.eq.s32.totalorder %s17, 0
    %p163 = por %p161, %p162
    %p164 = scmp.ne.s32.totalorder %s156, %s158
    %p165 = scmp.eq.s32.totalorder %s22, 2
    %p166 = por %p164, %p165
    %p167 = scmp.ne.s32.totalorder %s158, %s159
    %p168 = scmp.eq.s32.totalorder %s22, 0
    %p169 = por %p167, %p168
    %p170 = scmp.ne.s32.totalorder %s158, %s159
    %p171 = scmp.eq.s32.totalorder %s23, 2
    %p172 = por %p170, %p171
    %p174 = scmp.ne.s32.totalorder %s159, %s173
    %p175 = scmp.eq.s32.totalorder %s23, 0
    %p176 = por %p174, %p175
    %s178 = sadd.s32 %s177, 1
    %p181 = scmp.eq.s32.totalorder %s17, 2
    %p182 = scmp.ne.s32.totalorder %s177, %s179
    %p183 = scmp.eq.s32.totalorder %s17, 0
    %p184 = por %p182, %p183
    %p185 = scmp.ne.s32.totalorder %s177, %s179
    %p186 = scmp.eq.s32.totalorder %s22, 2
    %p187 = por %p185, %p186
    %p188 = scmp.ne.s32.totalorder %s179, %s180
    %p189 = scmp.eq.s32.totalorder %s22, 0
    %p190 = por %p188, %p189
    %p191 = scmp.ne.s32.totalorder %s179, %s180
    %p192 = scmp.eq.s32.totalorder %s23, 2
    %p193 = por %p191, %p192
    %p195 = scmp.ne.s32.totalorder %s180, %s194
    %p196 = scmp.eq.s32.totalorder %s23, 0
    %p197 = por %p195, %p196
    %s199 = sadd.s32 %s198, 1
    %p202 = scmp.eq.s32.totalorder %s17, 2
    %p203 = scmp.ne.s32.totalorder %s198, %s200
    %p204 = scmp.eq.s32.totalorder %s17, 0
    %p205 = por %p203, %p204
    %p206 = scmp.ne.s32.totalorder %s198, %s200
    %p207 = scmp.eq.s32.totalorder %s22, 2
    %p208 = por %p206, %p207
    %p209 = scmp.ne.s32.totalorder %s200, %s201
    %p210 = scmp.eq.s32.totalorder %s22, 0
    %p211 = por %p209, %p210
    %p212 = scmp.ne.s32.totalorder %s200, %s201
    %p213 = scmp.eq.s32.totalorder %s23, 2
    %p214 = por %p212, %p213
    %p216 = scmp.ne.s32.totalorder %s201, %s215
    %p217 = scmp.eq.s32.totalorder %s23, 0
    %p218 = por %p216, %p217
    %s220 = sadd.s32 %s219, 1
    %p223 = scmp.eq.s32.totalorder %s17, 2
    %p224 = scmp.ne.s32.totalorder %s219, %s221
    %p225 = scmp.eq.s32.totalorder %s17, 0
    %p226 = por %p224, %p225
    %p227 = scmp.ne.s32.totalorder %s219, %s221
    %p228 = scmp.eq.s32.totalorder %s22, 2
    %p229 = por %p227, %p228
    %p230 = scmp.ne.s32.totalorder %s221, %s222
    %p231 = scmp.eq.s32.totalorder %s22, 0
    %p232 = por %p230, %p231
    %p233 = scmp.ne.s32.totalorder %s221, %s222
    %p234 = scmp.eq.s32.totalorder %s23, 2
    %p235 = por %p233, %p234
    %p237 = scmp.ne.s32.totalorder %s222, %s236
    %p238 = scmp.eq.s32.totalorder %s23, 0
    %p239 = por %p237, %p238
    %s240 = ssub.s32 %s17, %s24
    %p241 = scmp.eq.s32.totalorder %s240, 0
    %s243 = sadd.s32 %s242, 1
    %s244 = scalar_select %p241, %s242, %s243
    %p247 = pneg %p241
    %p248 = scmp.eq.s32.totalorder %s17, 2
    %p249 = por %p247, %p248
    %p250 = scmp.ne.s32.totalorder %s242, %s245
    %p251 = scmp.eq.s32.totalorder %s17, 0
    %p252 = por %p250, %p251
    %p253 = scmp.ne.s32.totalorder %s242, %s245
    %p254 = scmp.eq.s32.totalorder %s22, 2
    %p255 = por %p253, %p254
    %p256 = scmp.ne.s32.totalorder %s245, %s246
    %p257 = scmp.eq.s32.totalorder %s22, 0
    %p258 = por %p256, %p257
    %p259 = scmp.ne.s32.totalorder %s245, %s246
    %p260 = scmp.eq.s32.totalorder %s23, 2
    %p261 = por %p259, %p260
    %p263 = scmp.ne.s32.totalorder %s246, %s262
    %p264 = scmp.eq.s32.totalorder %s23, 0
    %p265 = por %p263, %p264
    %p266 = scmp.le.s32.totalorder 1, %s17
    %p267 = scmp.lt.s32.totalorder %s17, 4
    %p268 = pnand %p266, %p267
    %p269 = pneg %p268
    // Predicated region
    $region9: #{tpu_custom_call.1} parent=5 // pred_check
      _
    $region10: #{tpu_custom_call.1} parent=5 // pred_check_branch
      %271 = sbr.rel (%p268) target = $region12
    $region11: #{tpu_custom_call.1} parent=5 // pred_region
      %s272 = ssub.s32 %s17, 1
      // Predicated region
      $region13: #{tpu_custom_call.1} parent=11 // pred_check
        %p273 = pneg %p64
      $region14: #{tpu_custom_call.1} parent=11 // pred_check_branch
        %275 = sbr.rel (%p273) target = $region16
      $region15: #{tpu_custom_call.1} parent=11 // pred_region
        _
      $region16: #{tpu_custom_call.1} parent=11 // pred_fallthru
        _
      // Predicated region
      $region17: #{tpu_custom_call.1} parent=11 // pred_check
        %p276 = pneg %p85
      $region18: #{tpu_custom_call.1} parent=11 // pred_check_branch
        %278 = sbr.rel (%p276) target = $region20
      $region19: #{tpu_custom_call.1} parent=11 // pred_region
        _
      $region20: #{tpu_custom_call.1} parent=11 // pred_fallthru
        _
      // Predicated region
      $region21: #{tpu_custom_call.1} parent=11 // pred_check
        %p279 = pneg %p106
      $region22: #{tpu_custom_call.1} parent=11 // pred_check_branch
        %281 = sbr.rel (%p279) target = $region24
      $region23: #{tpu_custom_call.1} parent=11 // pred_region
        _
      $region24: #{tpu_custom_call.1} parent=11 // pred_fallthru
        _
      // Predicated region
      $region25: #{tpu_custom_call.1} parent=11 // pred_check
        %p282 = pneg %p127
      $region26: #{tpu_custom_call.1} parent=11 // pred_check_branch
        %284 = sbr.rel (%p282) target = $region28
      $region27: #{tpu_custom_call.1} parent=11 // pred_region
        _
      $region28: #{tpu_custom_call.1} parent=11 // pred_fallthru
        _
      // Predicated region
      $region29: #{tpu_custom_call.1} parent=11 // pred_check
        %p285 = pneg %p148
      $region30: #{tpu_custom_call.1} parent=11 // pred_check_branch
        %287 = sbr.rel (%p285) target = $region32
      $region31: #{tpu_custom_call.1} parent=11 // pred_region
        _
      $region32: #{tpu_custom_call.1} parent=11 // pred_fallthru
        _
      // Predicated region
      $region33: #{tpu_custom_call.1} parent=11 // pred_check
        %p288 = pneg %p169
      $region34: #{tpu_custom_call.1} parent=11 // pred_check_branch
        %290 = sbr.rel (%p288) target = $region36
      $region35: #{tpu_custom_call.1} parent=11 // pred_region
        _
      $region36: #{tpu_custom_call.1} parent=11 // pred_fallthru
        _
      // Predicated region
      $region37: #{tpu_custom_call.1} parent=11 // pred_check
        %p291 = pneg %p190
      $region38: #{tpu_custom_call.1} parent=11 // pred_check_branch
        %293 = sbr.rel (%p291) target = $region40
      $region39: #{tpu_custom_call.1} parent=11 // pred_region
        _
      $region40: #{tpu_custom_call.1} parent=11 // pred_fallthru
        _
      // Predicated region
      $region41: #{tpu_custom_call.1} parent=11 // pred_check
        %p294 = pneg %p211
      $region42: #{tpu_custom_call.1} parent=11 // pred_check_branch
        %296 = sbr.rel (%p294) target = $region44
      $region43: #{tpu_custom_call.1} parent=11 // pred_region
        _
      $region44: #{tpu_custom_call.1} parent=11 // pred_fallthru
        _
      // Predicated region
      $region45: #{tpu_custom_call.1} parent=11 // pred_check
        %p297 = pneg %p232
      $region46: #{tpu_custom_call.1} parent=11 // pred_check_branch
        %299 = sbr.rel (%p297) target = $region48
      $region47: #{tpu_custom_call.1} parent=11 // pred_region
        _
      $region48: #{tpu_custom_call.1} parent=11 // pred_fallthru
        _
    $region12: #{tpu_custom_call.1} parent=5 // pred_fallthru
      _
    %p300 = scmp.lt.s32.totalorder %s17, 3
    // Predicated region
    $region49: #{tpu_custom_call.1} parent=5 // pred_check
      %p301 = pneg %p300
    $region50: #{tpu_custom_call.1} parent=5 // pred_check_branch
      %303 = sbr.rel (%p301) target = $region52
    $region51: #{tpu_custom_call.1} parent=5 // pred_region
      // Predicated region
      $region53: #{tpu_custom_call.1} parent=51 // pred_check
        %p304 = pneg %p37
      $region54: #{tpu_custom_call.1} parent=51 // pred_check_branch
        %306 = sbr.rel (%p304) target = $region56
      $region55: #{tpu_custom_call.1} parent=51 // pred_region
        %s307 = smul.u32 16, %s17
        %s308 = ssub.s32 38, %s307
        %p309 = scmp.lt.s32.totalorder %s308, 16
        %s310 = scalar_select %p309, %s308, 16
        %s311 = smul.u32 64, %s310
        %p312 = scmp.lt.s32.totalorder %s307, 37
        %s313 = scalar_select %p312, %s307, 37
        %s314 = smul.addr %s313, 4
        %s315 = scalar_lea.vmem %s0, %s314
        %s316 = smul.u32 16, %s17
        %s317 = ssub.s32 38, %s316
        %p318 = scmp.lt.s32.totalorder %s317, 16
        %s319 = scalar_select %p318, %s317, 16
        %s320 = smul.u32 64, %s319
      $region56: #{tpu_custom_call.1} parent=51 // pred_fallthru
        _
    $region52: #{tpu_custom_call.1} parent=5 // pred_fallthru
      _
    %p321 = scmp.le.s32.totalorder 1, %s17
    %p322 = scmp.lt.s32.totalorder %s17, 4
    %p323 = pnand %p321, %p322
    %p324 = pneg %p323
    // Predicated region
    $region57: #{tpu_custom_call.1} parent=5 // pred_check
      _
    $region58: #{tpu_custom_call.1} parent=5 // pred_check_branch
      %326 = sbr.rel (%p323) target = $region60
    $region59: #{tpu_custom_call.1} parent=5 // pred_region
      %s327 = ssub.s32 %s17, 1
      %s328 = smul.u32 16, %s22
      %s329 = ssub.s32 38, %s328
      %p330 = scmp.lt.s32.totalorder %s329, 16
      %s331 = scalar_select %p330, %s329, 16
      %s332 = smul.u32 64, %s331
      %p333 = scmp.lt.s32.totalorder %s328, 37
      %s334 = scalar_select %p333, %s328, 37
      %s335 = smul.addr %s334, 4
      %s336 = scalar_lea.vmem %s0, %s335
      %p337 = pneg %p43
      %p338 = pneg %p40
      %p339 = pneg %p64
      %p340 = pneg %p61
      %p341 = pneg %p85
      %p342 = pneg %p82
      %p343 = pneg %p106
      %p344 = pneg %p103
      %p345 = pneg %p127
      %p346 = pneg %p124
      %p347 = pneg %p148
      %p348 = pneg %p145
      %p349 = pneg %p169
      %p350 = pneg %p166
      %p351 = pneg %p190
      %p352 = pneg %p187
      %p353 = pneg %p211
      %p354 = pneg %p208
      %p355 = pneg %p232
      %p356 = pneg %p229
      %p357 = pneg %p258
      %p358 = pneg %p255
      %s359 = smul.u32 16, %s22
      %p360 = scmp.lt.s32.totalorder %s359, 47
      %s361 = scalar_select %p360, %s359, 47
      %s362 = smul.addr %s361, 8
      %s363 = scalar_lea.vmem %s10, %s362
      %s364 = smul.u32 16, %s22
      %s365 = ssub.s32 38, %s364
      %p366 = scmp.lt.s32.totalorder %s365, 16
      %s367 = scalar_select %p366, %s365, 16
      %s368 = smul.u32 64, %s367
      %p369 = scmp.lt.s32.totalorder %s364, 37
      %s370 = scalar_select %p369, %s364, 37
      %s371 = smul.addr %s370, 4
      %s372 = scalar_lea.vmem %s0, %s371
      %s373 = smul.u32 16, %s22
      %s374 = ssub.s32 38, %s373
      %p375 = scmp.lt.s32.totalorder %s374, 16
      %s376 = scalar_select %p375, %s374, 16
      %s377 = smul.u32 64, %s376
      %s378 = smul.u32 16, %s22
      %p379 = scmp.lt.s32.totalorder %s378, 47
      %s380 = scalar_select %p379, %s378, 47
      %s381 = smul.addr %s380, 8
      %s382 = scalar_lea.vmem %s10, %s381
      %s383 = smul.u32 16, %s22
      %v385 = vld [vmem:[%s372] sm:$0xf]
      %v386 = vld [vmem:[%s372 + $0x4] sm:$0xf]
      %v387 = vld [vmem:[%s372 + $0x8] sm:$0xf]
      %v388 = vld [vmem:[%s372 + $0xc] sm:$0xf]
      %v389 = vld [vmem:[%s372 + $0x10] sm:$0xf]
      %v390 = vld [vmem:[%s372 + $0x14] sm:$0xf]
      %v391 = vld [vmem:[%s372 + $0x18] sm:$0xf]
      %v392 = vld [vmem:[%s372 + $0x1c] sm:$0xf]
      %v393 = vld [vmem:[%s372 + $0x20] sm:$0xf]
      %v394 = vld [vmem:[%s372 + $0x24] sm:$0xf]
      %v395 = vld [vmem:[%s372 + $0x28] sm:$0xf]
      %v396 = vld [vmem:[%s372 + $0x2c] sm:$0xf]
      %v397 = vld [vmem:[%s372 + $0x30] sm:$0xf]
      %v398 = vld [vmem:[%s372 + $0x34] sm:$0xf]
      %v399 = vld [vmem:[%s372 + $0x38] sm:$0xf]
      %v400 = vld [vmem:[%s372 + $0x3c] sm:$0xf]
      %v401 = vunpack.c.l.bf16 %v385
      %v402 = vunpack.c.l.bf16 %v386
      %v403 = vunpack.c.l.bf16 %v387
      %v404 = vunpack.c.l.bf16 %v388
      %v405 = vunpack.c.l.bf16 %v389
      %v406 = vunpack.c.l.bf16 %v390
      %v407 = vunpack.c.l.bf16 %v391
      %v408 = vunpack.c.l.bf16 %v392
      %v409 = vunpack.c.l.bf16 %v393
      %v410 = vunpack.c.l.bf16 %v394
      %v411 = vunpack.c.l.bf16 %v395
      %v412 = vunpack.c.l.bf16 %v396
      %v413 = vunpack.c.l.bf16 %v397
      %v414 = vunpack.c.l.bf16 %v398
      %v415 = vunpack.c.l.bf16 %v399
      %v416 = vunpack.c.l.bf16 %v400
      %v417 = vld [vmem:[%s2] sm:$0x1]
      %v418 = vld [vmem:[%s1] sm:$0xf]
      %v419 = vld [vmem:[%s1 + $0x4] sm:$0xf]
      %v420 = vld [vmem:[%s1 + $0x8] sm:$0xf]
      %v421 = vld [vmem:[%s1 + $0xc] sm:$0xf]
      %v422 = vld [vmem:[%s1 + $0x10] sm:$0xf]
      %v439 = vunpack.c.l.b16 %v385
      %v440 = vunpack.c.l.b16 %v386
      %v441 = vunpack.c.l.b16 %v387
      %v442 = vunpack.c.l.b16 %v388
      %v443 = vunpack.c.l.b16 %v389
      %v444 = vunpack.c.l.b16 %v390
      %v445 = vunpack.c.l.b16 %v391
      %v446 = vunpack.c.l.b16 %v392
      %v447 = vunpack.c.l.b16 %v393
      %v448 = vunpack.c.l.b16 %v394
      %v449 = vunpack.c.l.b16 %v395
      %v450 = vunpack.c.l.b16 %v396
      %v451 = vunpack.c.l.b16 %v397
      %v452 = vunpack.c.l.b16 %v398
      %v453 = vunpack.c.l.b16 %v399
      %v454 = vunpack.c.l.b16 %v400
      %v455 = vpack.c.b16 %v440, %v439
      %v456 = vpack.c.b16 %v442, %v441
      %v457 = vpack.c.b16 %v444, %v443
      %v458 = vpack.c.b16 %v446, %v445
      %v459 = vpack.c.b16 %v448, %v447
      %v460 = vpack.c.b16 %v450, %v449
      %v461 = vpack.c.b16 %v452, %v451
      %v462 = vpack.c.b16 %v454, %v453
      %v468 = vunpack.c.l.b16 %v418
      %v469 = vunpack.c.l.b16 %v419
      %v470 = vunpack.c.l.b16 %v420
      %v471 = vunpack.c.l.b16 %v421
      %v472 = vunpack.c.l.b16 %v422
      %v473 = vpack.c.b16 %v469, %v468
      %v474 = vpack.c.b16 %v471, %v470
      %v475 = vpack.c.b16 %v472, %v472
      %vm478 = vcmask 326656
      %v480 = vsel %vm478, %v455, 0
      %v483 = vsel %vm478, %v456, 0
      %v486 = vsel %vm478, %v457, 0
      %v489 = vsel %vm478, %v458, 0
      %v492 = vsel %vm478, %v459, 0
      %v495 = vsel %vm478, %v460, 0
      %v498 = vsel %vm478, %v461, 0
      %v501 = vsel %vm478, %v462, 0
      %vm503 = vcmask 1043456
      %v505 = vsel %vm503, %v475, 0
      %507 = vmatprep.subr.bf16.mxu0 0
      %508 = vmatpush1.bf16.msra.mxu0 0
      %509 = vmatprep.subr.bf16.mxu0 0
      %510 = vmatpush1.bf16.msra.mxu0 0
      %511 = vmatprep.subr.bf16.mxu0 0
      %512 = vmatpush1.bf16.msra.mxu0 0
      %513 = vmatprep.subr.bf16.mxu0 0
      %514 = vmatpush1.bf16.msra.mxu0 0
      %515 = vmatprep.subr.bf16.mxu0 0
      %516 = vmatpush1.bf16.msra.mxu0 0
      %517 = vmatprep.subr.bf16.mxu0 0
      %518 = vmatpush1.bf16.msra.mxu0 %v505
      %519 = vmatprep.subr.bf16.mxu0 0
      %520 = vmatpush1.bf16.msra.mxu0 %v474
      %521 = vmatprep.subr.bf16.mxu0 0
      %522 = vmatpush1.bf16.msra.mxu0 %v473
      %523 = vmatprep.subr.bf16.mxu0 0
      %524 = vmatpush2.bf16.msra.mxu0 0
      %525 = vmatprep.subr.bf16.mxu0 0
      %526 = vmatpush2.bf16.msra.mxu0 0
      %527 = vmatprep.subr.bf16.mxu0 0
      %528 = vmatpush2.bf16.msra.mxu0 0
      %529 = vmatprep.subr.bf16.mxu0 0
      %530 = vmatpush2.bf16.msra.mxu0 0
      %531 = vmatprep.subr.bf16.mxu0 0
      %532 = vmatpush2.bf16.msra.mxu0 0
      %533 = vmatprep.subr.bf16.mxu0 0
      %534 = vmatpush2.bf16.msra.mxu0 0
      %535 = vmatprep.subr.bf16.mxu0 0
      %536 = vmatpush2.bf16.msra.mxu0 0
      %537 = vmatprep.subr.bf16.mxu0 0
      %538 = vmatpush2.bf16.msra.mxu0 0
      %539 = vmatprep.mubr.bf16.mxu0 0
      %540 = vmatmul.mubr.bf16.gmra.mxu0 %v480
      %v541 = vpop.f32.mrf.mxu0
      %v542 = vadd.f32 0.0, %v541
      %v543 = vpop.f32.mrf.mxu0
      %v544 = vpop.f32.mrf.mxu0
      %v545 = vadd.f32 0.0, %v544
      %v546 = vpop.f32.mrf.mxu0
      %547 = vmatprep.mubr.bf16.mxu0 0
      %548 = vmatmul.mubr.bf16.gmra.mxu0 %v483
      %v549 = vpop.f32.mrf.mxu0
      %v550 = vadd.f32 0.0, %v549
      %v551 = vpop.f32.mrf.mxu0
      %v552 = vpop.f32.mrf.mxu0
      %v553 = vadd.f32 0.0, %v552
      %v554 = vpop.f32.mrf.mxu0
      %555 = vmatprep.mubr.bf16.mxu0 0
      %556 = vmatmul.mubr.bf16.gmra.mxu0 %v486
      %v557 = vpop.f32.mrf.mxu0
      %v558 = vadd.f32 0.0, %v557
      %v559 = vpop.f32.mrf.mxu0
      %v560 = vpop.f32.mrf.mxu0
      %v561 = vadd.f32 0.0, %v560
      %v562 = vpop.f32.mrf.mxu0
      %563 = vmatprep.mubr.bf16.mxu0 0
      %564 = vmatmul.mubr.bf16.gmra.mxu0 %v489
      %v565 = vpop.f32.mrf.mxu0
      %v566 = vadd.f32 0.0, %v565
      %v567 = vpop.f32.mrf.mxu0
      %v568 = vpop.f32.mrf.mxu0
      %v569 = vadd.f32 0.0, %v568
      %v570 = vpop.f32.mrf.mxu0
      %571 = vmatprep.mubr.bf16.mxu0 0
      %572 = vmatmul.mubr.bf16.gmra.mxu0 %v492
      %v573 = vpop.f32.mrf.mxu0
      %v574 = vadd.f32 0.0, %v573
      %v575 = vpop.f32.mrf.mxu0
      %v576 = vpop.f32.mrf.mxu0
      %v577 = vadd.f32 0.0, %v576
      %v578 = vpop.f32.mrf.mxu0
      %579 = vmatprep.mubr.bf16.mxu0 0
      %580 = vmatmul.mubr.bf16.gmra.mxu0 %v495
      %v581 = vpop.f32.mrf.mxu0
      %v582 = vadd.f32 0.0, %v581
      %v583 = vpop.f32.mrf.mxu0
      %v584 = vpop.f32.mrf.mxu0
      %v585 = vadd.f32 0.0, %v584
      %v586 = vpop.f32.mrf.mxu0
      %587 = vmatprep.mubr.bf16.mxu0 0
      %588 = vmatmul.mubr.bf16.gmra.mxu0 %v498
      %v589 = vpop.f32.mrf.mxu0
      %v590 = vadd.f32 0.0, %v589
      %v591 = vpop.f32.mrf.mxu0
      %v592 = vpop.f32.mrf.mxu0
      %v593 = vadd.f32 0.0, %v592
      %v594 = vpop.f32.mrf.mxu0
      %595 = vmatprep.mubr.bf16.mxu0 0
      %596 = vmatmul.mubr.bf16.gmra.mxu0 %v501
      %v597 = vpop.f32.mrf.mxu0
      %v598 = vadd.f32 0.0, %v597
      %v599 = vpop.f32.mrf.mxu0
      %v600 = vpop.f32.mrf.mxu0
      %v601 = vadd.f32 0.0, %v600
      %v602 = vpop.f32.mrf.mxu0
      %603 = vdwg.mxu0
      %v604 = vmul.f32 %v401, %v542
      %v605 = vmul.f32 %v402, %v545
      %v606 = vmul.f32 %v403, %v550
      %v607 = vmul.f32 %v404, %v553
      %v608 = vmul.f32 %v405, %v558
      %v609 = vmul.f32 %v406, %v561
      %v610 = vmul.f32 %v407, %v566
      %v611 = vmul.f32 %v408, %v569
      %v612 = vmul.f32 %v409, %v574
      %v613 = vmul.f32 %v410, %v577
      %v614 = vmul.f32 %v411, %v582
      %v615 = vmul.f32 %v412, %v585
      %v616 = vmul.f32 %v413, %v590
      %v617 = vmul.f32 %v414, %v593
      %v618 = vmul.f32 %v415, %v598
      %v619 = vmul.f32 %v416, %v601
      %v620 = vlaneseq
      %v621 = vshrl.u32 %v620, 7
      %v622 = vsub.s32 0, %v621
      %v623 = vrot.slane %v417, %v622
      %v624 = vadd.f32 %v604, %v623
      %v625 = vadd.f32 %v605, %v623
      %v626 = vadd.f32 %v606, %v623
      %v627 = vadd.f32 %v607, %v623
      %v628 = vadd.f32 %v608, %v623
      %v629 = vadd.f32 %v609, %v623
      %v630 = vadd.f32 %v610, %v623
      %v631 = vadd.f32 %v611, %v623
      %v632 = vadd.f32 %v612, %v623
      %v633 = vadd.f32 %v613, %v623
      %v634 = vadd.f32 %v614, %v623
      %v635 = vadd.f32 %v615, %v623
      %v636 = vadd.f32 %v616, %v623
      %v637 = vadd.f32 %v617, %v623
      %v638 = vadd.f32 %v618, %v623
      %v639 = vadd.f32 %v619, %v623
      %v640 = vadd.f32 %v624, %v401
      %v641 = vadd.f32 %v625, %v402
      %v642 = vadd.f32 %v626, %v403
      %v643 = vadd.f32 %v627, %v404
      %v644 = vadd.f32 %v628, %v405
      %v645 = vadd.f32 %v629, %v406
      %v646 = vadd.f32 %v630, %v407
      %v647 = vadd.f32 %v631, %v408
      %v648 = vadd.f32 %v632, %v409
      %v649 = vadd.f32 %v633, %v410
      %v650 = vadd.f32 %v634, %v411
      %v651 = vadd.f32 %v635, %v412
      %v652 = vadd.f32 %v636, %v413
      %v653 = vadd.f32 %v637, %v414
      %v654 = vadd.f32 %v638, %v415
      %v655 = vadd.f32 %v639, %v416
      %v656 = vld [vmem:[%s2 + $0x1] sm:$0x1]
      %s657 = scalar_lea.vmem %s1, 20
      %v658 = vld [vmem:[%s657] sm:$0xf]
      %v659 = vld [vmem:[%s657 + $0x4] sm:$0xf]
      %v660 = vld [vmem:[%s657 + $0x8] sm:$0xf]
      %v661 = vld [vmem:[%s657 + $0xc] sm:$0xf]
      %v662 = vld [vmem:[%s657 + $0x10] sm:$0xf]
      %v663 = vpack.c.bf16 %v641, %v640
      %v664 = vpack.c.bf16 %v643, %v642
      %v665 = vpack.c.bf16 %v645, %v644
      %v666 = vpack.c.bf16 %v647, %v646
      %v667 = vpack.c.bf16 %v649, %v648
      %v668 = vpack.c.bf16 %v651, %v650
      %v669 = vpack.c.bf16 %v653, %v652
      %v670 = vpack.c.bf16 %v655, %v654
      %v676 = vunpack.c.l.b16 %v658
      %v677 = vunpack.c.l.b16 %v659
      %v678 = vunpack.c.l.b16 %v660
      %v679 = vunpack.c.l.b16 %v661
      %v680 = vunpack.c.l.b16 %v662
      %v681 = vpack.c.b16 %v677, %v676
      %v682 = vpack.c.b16 %v679, %v678
      %v683 = vpack.c.b16 %v680, %v680
      %v687 = vsel %vm478, %v663, 0
      %v690 = vsel %vm478, %v664, 0
      %v693 = vsel %vm478, %v665, 0
      %v696 = vsel %vm478, %v666, 0
      %v699 = vsel %vm478, %v667, 0
      %v702 = vsel %vm478, %v668, 0
      %v705 = vsel %vm478, %v669, 0
      %v708 = vsel %vm478, %v670, 0
      %v711 = vsel %vm503, %v683, 0
      %713 = vmatprep.subr.bf16.mxu0 0
      %714 = vmatpush1.bf16.msra.mxu0 0
      %715 = vmatprep.subr.bf16.mxu0 0
      %716 = vmatpush1.bf16.msra.mxu0 0
      %717 = vmatprep.subr.bf16.mxu0 0
      %718 = vmatpush1.bf16.msra.mxu0 0
      %719 = vmatprep.subr.bf16.mxu0 0
      %720 = vmatpush1.bf16.msra.mxu0 0
      %721 = vmatprep.subr.bf16.mxu0 0
      %722 = vmatpush1.bf16.msra.mxu0 0
      %723 = vmatprep.subr.bf16.mxu0 0
      %724 = vmatpush1.bf16.msra.mxu0 %v711
      %725 = vmatprep.subr.bf16.mxu0 0
      %726 = vmatpush1.bf16.msra.mxu0 %v682
      %727 = vmatprep.subr.bf16.mxu0 0
      %728 = vmatpush1.bf16.msra.mxu0 %v681
      %729 = vmatprep.subr.bf16.mxu0 0
      %730 = vmatpush2.bf16.msra.mxu0 0
      %731 = vmatprep.subr.bf16.mxu0 0
      %732 = vmatpush2.bf16.msra.mxu0 0
      %733 = vmatprep.subr.bf16.mxu0 0
      %734 = vmatpush2.bf16.msra.mxu0 0
      %735 = vmatprep.subr.bf16.mxu0 0
      %736 = vmatpush2.bf16.msra.mxu0 0
      %737 = vmatprep.subr.bf16.mxu0 0
      %738 = vmatpush2.bf16.msra.mxu0 0
      %739 = vmatprep.subr.bf16.mxu0 0
      %740 = vmatpush2.bf16.msra.mxu0 0
      %741 = vmatprep.subr.bf16.mxu0 0
      %742 = vmatpush2.bf16.msra.mxu0 0
      %743 = vmatprep.subr.bf16.mxu0 0
      %744 = vmatpush2.bf16.msra.mxu0 0
      %745 = vmatprep.mubr.bf16.mxu0 0
      %746 = vmatmul.mubr.bf16.gmra.mxu0 %v687
      %v747 = vpop.f32.mrf.mxu0
      %v748 = vadd.f32 0.0, %v747
      %v749 = vpop.f32.mrf.mxu0
      %v750 = vpop.f32.mrf.mxu0
      %v751 = vadd.f32 0.0, %v750
      %v752 = vpop.f32.mrf.mxu0
      %753 = vmatprep.mubr.bf16.mxu0 0
      %754 = vmatmul.mubr.bf16.gmra.mxu0 %v690
      %v755 = vpop.f32.mrf.mxu0
      %v756 = vadd.f32 0.0, %v755
      %v757 = vpop.f32.mrf.mxu0
      %v758 = vpop.f32.mrf.mxu0
      %v759 = vadd.f32 0.0, %v758
      %v760 = vpop.f32.mrf.mxu0
      %761 = vmatprep.mubr.bf16.mxu0 0
      %762 = vmatmul.mubr.bf16.gmra.mxu0 %v693
      %v763 = vpop.f32.mrf.mxu0
      %v764 = vadd.f32 0.0, %v763
      %v765 = vpop.f32.mrf.mxu0
      %v766 = vpop.f32.mrf.mxu0
      %v767 = vadd.f32 0.0, %v766
      %v768 = vpop.f32.mrf.mxu0
      %769 = vmatprep.mubr.bf16.mxu0 0
      %770 = vmatmul.mubr.bf16.gmra.mxu0 %v696
      %v771 = vpop.f32.mrf.mxu0
      %v772 = vadd.f32 0.0, %v771
      %v773 = vpop.f32.mrf.mxu0
      %v774 = vpop.f32.mrf.mxu0
      %v775 = vadd.f32 0.0, %v774
      %v776 = vpop.f32.mrf.mxu0
      %777 = vmatprep.mubr.bf16.mxu0 0
      %778 = vmatmul.mubr.bf16.gmra.mxu0 %v699
      %v779 = vpop.f32.mrf.mxu0
      %v780 = vadd.f32 0.0, %v779
      %v781 = vpop.f32.mrf.mxu0
      %v782 = vpop.f32.mrf.mxu0
      %v783 = vadd.f32 0.0, %v782
      %v784 = vpop.f32.mrf.mxu0
      %785 = vmatprep.mubr.bf16.mxu0 0
      %786 = vmatmul.mubr.bf16.gmra.mxu0 %v702
      %v787 = vpop.f32.mrf.mxu0
      %v788 = vadd.f32 0.0, %v787
      %v789 = vpop.f32.mrf.mxu0
      %v790 = vpop.f32.mrf.mxu0
      %v791 = vadd.f32 0.0, %v790
      %v792 = vpop.f32.mrf.mxu0
      %793 = vmatprep.mubr.bf16.mxu0 0
      %794 = vmatmul.mubr.bf16.gmra.mxu0 %v705
      %v795 = vpop.f32.mrf.mxu0
      %v796 = vadd.f32 0.0, %v795
      %v797 = vpop.f32.mrf.mxu0
      %v798 = vpop.f32.mrf.mxu0
      %v799 = vadd.f32 0.0, %v798
      %v800 = vpop.f32.mrf.mxu0
      %801 = vmatprep.mubr.bf16.mxu0 0
      %802 = vmatmul.mubr.bf16.gmra.mxu0 %v708
      %v803 = vpop.f32.mrf.mxu0
      %v804 = vadd.f32 0.0, %v803
      %v805 = vpop.f32.mrf.mxu0
      %v806 = vpop.f32.mrf.mxu0
      %v807 = vadd.f32 0.0, %v806
      %v808 = vpop.f32.mrf.mxu0
      %809 = vdwg.mxu0
      %v810 = vmul.f32 %v401, %v748
      %v811 = vmul.f32 %v402, %v751
      %v812 = vmul.f32 %v403, %v756
      %v813 = vmul.f32 %v404, %v759
      %v814 = vmul.f32 %v405, %v764
      %v815 = vmul.f32 %v406, %v767
      %v816 = vmul.f32 %v407, %v772
      %v817 = vmul.f32 %v408, %v775
      %v818 = vmul.f32 %v409, %v780
      %v819 = vmul.f32 %v410, %v783
      %v820 = vmul.f32 %v411, %v788
      %v821 = vmul.f32 %v412, %v791
      %v822 = vmul.f32 %v413, %v796
      %v823 = vmul.f32 %v414, %v799
      %v824 = vmul.f32 %v415, %v804
      %v825 = vmul.f32 %v416, %v807
      %v826 = vlaneseq
      %v827 = vshrl.u32 %v826, 7
      %v828 = vsub.s32 0, %v827
      %v829 = vrot.slane %v656, %v828
      %v830 = vadd.f32 %v810, %v829
      %v831 = vadd.f32 %v811, %v829
      %v832 = vadd.f32 %v812, %v829
      %v833 = vadd.f32 %v813, %v829
      %v834 = vadd.f32 %v814, %v829
      %v835 = vadd.f32 %v815, %v829
      %v836 = vadd.f32 %v816, %v829
      %v837 = vadd.f32 %v817, %v829
      %v838 = vadd.f32 %v818, %v829
      %v839 = vadd.f32 %v819, %v829
      %v840 = vadd.f32 %v820, %v829
      %v841 = vadd.f32 %v821, %v829
      %v842 = vadd.f32 %v822, %v829
      %v843 = vadd.f32 %v823, %v829
      %v844 = vadd.f32 %v824, %v829
      %v845 = vadd.f32 %v825, %v829
      %v846 = vadd.f32 %v830, %v640
      %v847 = vadd.f32 %v831, %v641
      %v848 = vadd.f32 %v832, %v642
      %v849 = vadd.f32 %v833, %v643
      %v850 = vadd.f32 %v834, %v644
      %v851 = vadd.f32 %v835, %v645
      %v852 = vadd.f32 %v836, %v646
      %v853 = vadd.f32 %v837, %v647
      %v854 = vadd.f32 %v838, %v648
      %v855 = vadd.f32 %v839, %v649
      %v856 = vadd.f32 %v840, %v650
      %v857 = vadd.f32 %v841, %v651
      %v858 = vadd.f32 %v842, %v652
      %v859 = vadd.f32 %v843, %v653
      %v860 = vadd.f32 %v844, %v654
      %v861 = vadd.f32 %v845, %v655
      %v862 = vld [vmem:[%s2 + $0x2] sm:$0x1]
      %s863 = scalar_lea.vmem %s1, 40
      %v864 = vld [vmem:[%s863] sm:$0xf]
      %v865 = vld [vmem:[%s863 + $0x4] sm:$0xf]
      %v866 = vld [vmem:[%s863 + $0x8] sm:$0xf]
      %v867 = vld [vmem:[%s863 + $0xc] sm:$0xf]
      %v868 = vld [vmem:[%s863 + $0x10] sm:$0xf]
      %v869 = vpack.c.bf16 %v847, %v846
      %v870 = vpack.c.bf16 %v849, %v848
      %v871 = vpack.c.bf16 %v851, %v850
      %v872 = vpack.c.bf16 %v853, %v852
      %v873 = vpack.c.bf16 %v855, %v854
      %v874 = vpack.c.bf16 %v857, %v856
      %v875 = vpack.c.bf16 %v859, %v858
      %v876 = vpack.c.bf16 %v861, %v860
      %v882 = vunpack.c.l.b16 %v864
      %v883 = vunpack.c.l.b16 %v865
      %v884 = vunpack.c.l.b16 %v866
      %v885 = vunpack.c.l.b16 %v867
      %v886 = vunpack.c.l.b16 %v868
      %v887 = vpack.c.b16 %v883, %v882
      %v888 = vpack.c.b16 %v885, %v884
      %v889 = vpack.c.b16 %v886, %v886
      %v893 = vsel %vm478, %v869, 0
      %v896 = vsel %vm478, %v870, 0
      %v899 = vsel %vm478, %v871, 0
      %v902 = vsel %vm478, %v872, 0
      %v905 = vsel %vm478, %v873, 0
      %v908 = vsel %vm478, %v874, 0
      %v911 = vsel %vm478, %v875, 0
      %v914 = vsel %vm478, %v876, 0
      %v917 = vsel %vm503, %v889, 0
      %919 = vmatprep.subr.bf16.mxu0 0
      %920 = vmatpush1.bf16.msra.mxu0 0
      %921 = vmatprep.subr.bf16.mxu0 0
      %922 = vmatpush1.bf16.msra.mxu0 0
      %923 = vmatprep.subr.bf16.mxu0 0
      %924 = vmatpush1.bf16.msra.mxu0 0
      %925 = vmatprep.subr.bf16.mxu0 0
      %926 = vmatpush1.bf16.msra.mxu0 0
      %927 = vmatprep.subr.bf16.mxu0 0
      %928 = vmatpush1.bf16.msra.mxu0 0
      %929 = vmatprep.subr.bf16.mxu0 0
      %930 = vmatpush1.bf16.msra.mxu0 %v917
      %931 = vmatprep.subr.bf16.mxu0 0
      %932 = vmatpush1.bf16.msra.mxu0 %v888
      %933 = vmatprep.subr.bf16.mxu0 0
      %934 = vmatpush1.bf16.msra.mxu0 %v887
      %935 = vmatprep.subr.bf16.mxu0 0
      %936 = vmatpush2.bf16.msra.mxu0 0
      %937 = vmatprep.subr.bf16.mxu0 0
      %938 = vmatpush2.bf16.msra.mxu0 0
      %939 = vmatprep.subr.bf16.mxu0 0
      %940 = vmatpush2.bf16.msra.mxu0 0
      %941 = vmatprep.subr.bf16.mxu0 0
      %942 = vmatpush2.bf16.msra.mxu0 0
      %943 = vmatprep.subr.bf16.mxu0 0
      %944 = vmatpush2.bf16.msra.mxu0 0
      %945 = vmatprep.subr.bf16.mxu0 0
      %946 = vmatpush2.bf16.msra.mxu0 0
      %947 = vmatprep.subr.bf16.mxu0 0
      %948 = vmatpush2.bf16.msra.mxu0 0
      %949 = vmatprep.subr.bf16.mxu0 0
      %950 = vmatpush2.bf16.msra.mxu0 0
      %951 = vmatprep.mubr.bf16.mxu0 0
      %952 = vmatmul.mubr.bf16.gmra.mxu0 %v893
      %v953 = vpop.f32.mrf.mxu0
      %v954 = vadd.f32 0.0, %v953
      %v955 = vpop.f32.mrf.mxu0
      %v956 = vpop.f32.mrf.mxu0
      %v957 = vadd.f32 0.0, %v956
      %v958 = vpop.f32.mrf.mxu0
      %959 = vmatprep.mubr.bf16.mxu0 0
      %960 = vmatmul.mubr.bf16.gmra.mxu0 %v896
      %v961 = vpop.f32.mrf.mxu0
      %v962 = vadd.f32 0.0, %v961
      %v963 = vpop.f32.mrf.mxu0
      %v964 = vpop.f32.mrf.mxu0
      %v965 = vadd.f32 0.0, %v964
      %v966 = vpop.f32.mrf.mxu0
      %967 = vmatprep.mubr.bf16.mxu0 0
      %968 = vmatmul.mubr.bf16.gmra.mxu0 %v899
      %v969 = vpop.f32.mrf.mxu0
      %v970 = vadd.f32 0.0, %v969
      %v971 = vpop.f32.mrf.mxu0
      %v972 = vpop.f32.mrf.mxu0
      %v973 = vadd.f32 0.0, %v972
      %v974 = vpop.f32.mrf.mxu0
      %975 = vmatprep.mubr.bf16.mxu0 0
      %976 = vmatmul.mubr.bf16.gmra.mxu0 %v902
      %v977 = vpop.f32.mrf.mxu0
      %v978 = vadd.f32 0.0, %v977
      %v979 = vpop.f32.mrf.mxu0
      %v980 = vpop.f32.mrf.mxu0
      %v981 = vadd.f32 0.0, %v980
      %v982 = vpop.f32.mrf.mxu0
      %983 = vmatprep.mubr.bf16.mxu0 0
      %984 = vmatmul.mubr.bf16.gmra.mxu0 %v905
      %v985 = vpop.f32.mrf.mxu0
      %v986 = vadd.f32 0.0, %v985
      %v987 = vpop.f32.mrf.mxu0
      %v988 = vpop.f32.mrf.mxu0
      %v989 = vadd.f32 0.0, %v988
      %v990 = vpop.f32.mrf.mxu0
      %991 = vmatprep.mubr.bf16.mxu0 0
      %992 = vmatmul.mubr.bf16.gmra.mxu0 %v908
      %v993 = vpop.f32.mrf.mxu0
      %v994 = vadd.f32 0.0, %v993
      %v995 = vpop.f32.mrf.mxu0
      %v996 = vpop.f32.mrf.mxu0
      %v997 = vadd.f32 0.0, %v996
      %v998 = vpop.f32.mrf.mxu0
      %999 = vmatprep.mubr.bf16.mxu0 0
      %1000 = vmatmul.mubr.bf16.gmra.mxu0 %v911
      %v1001 = vpop.f32.mrf.mxu0
      %v1002 = vadd.f32 0.0, %v1001
      %v1003 = vpop.f32.mrf.mxu0
      %v1004 = vpop.f32.mrf.mxu0
      %v1005 = vadd.f32 0.0, %v1004
      %v1006 = vpop.f32.mrf.mxu0
      %1007 = vmatprep.mubr.bf16.mxu0 0
      %1008 = vmatmul.mubr.bf16.gmra.mxu0 %v914
      %v1009 = vpop.f32.mrf.mxu0
      %v1010 = vadd.f32 0.0, %v1009
      %v1011 = vpop.f32.mrf.mxu0
      %v1012 = vpop.f32.mrf.mxu0
      %v1013 = vadd.f32 0.0, %v1012
      %v1014 = vpop.f32.mrf.mxu0
      %1015 = vdwg.mxu0
      %v1016 = vmul.f32 %v401, %v954
      %v1017 = vmul.f32 %v402, %v957
      %v1018 = vmul.f32 %v403, %v962
      %v1019 = vmul.f32 %v404, %v965
      %v1020 = vmul.f32 %v405, %v970
      %v1021 = vmul.f32 %v406, %v973
      %v1022 = vmul.f32 %v407, %v978
      %v1023 = vmul.f32 %v408, %v981
      %v1024 = vmul.f32 %v409, %v986
      %v1025 = vmul.f32 %v410, %v989
      %v1026 = vmul.f32 %v411, %v994
      %v1027 = vmul.f32 %v412, %v997
      %v1028 = vmul.f32 %v413, %v1002
      %v1029 = vmul.f32 %v414, %v1005
      %v1030 = vmul.f32 %v415, %v1010
      %v1031 = vmul.f32 %v416, %v1013
      %v1032 = vlaneseq
      %v1033 = vshrl.u32 %v1032, 7
      %v1034 = vsub.s32 0, %v1033
      %v1035 = vrot.slane %v862, %v1034
      %v1036 = vadd.f32 %v1016, %v1035
      %v1037 = vadd.f32 %v1017, %v1035
      %v1038 = vadd.f32 %v1018, %v1035
      %v1039 = vadd.f32 %v1019, %v1035
      %v1040 = vadd.f32 %v1020, %v1035
      %v1041 = vadd.f32 %v1021, %v1035
      %v1042 = vadd.f32 %v1022, %v1035
      %v1043 = vadd.f32 %v1023, %v1035
      %v1044 = vadd.f32 %v1024, %v1035
      %v1045 = vadd.f32 %v1025, %v1035
      %v1046 = vadd.f32 %v1026, %v1035
      %v1047 = vadd.f32 %v1027, %v1035
      %v1048 = vadd.f32 %v1028, %v1035
      %v1049 = vadd.f32 %v1029, %v1035
      %v1050 = vadd.f32 %v1030, %v1035
      %v1051 = vadd.f32 %v1031, %v1035
      %v1052 = vadd.f32 %v1036, %v846
      %v1053 = vadd.f32 %v1037, %v847
      %v1054 = vadd.f32 %v1038, %v848
      %v1055 = vadd.f32 %v1039, %v849
      %v1056 = vadd.f32 %v1040, %v850
      %v1057 = vadd.f32 %v1041, %v851
      %v1058 = vadd.f32 %v1042, %v852
      %v1059 = vadd.f32 %v1043, %v853
      %v1060 = vadd.f32 %v1044, %v854
      %v1061 = vadd.f32 %v1045, %v855
      %v1062 = vadd.f32 %v1046, %v856
      %v1063 = vadd.f32 %v1047, %v857
      %v1064 = vadd.f32 %v1048, %v858
      %v1065 = vadd.f32 %v1049, %v859
      %v1066 = vadd.f32 %v1050, %v860
      %v1067 = vadd.f32 %v1051, %v861
      %v1068 = vld [vmem:[%s3] sm:$0xf]
      %v1069 = vld [vmem:[%s3 + $0x4] sm:$0xf]
      %v1070 = vld [vmem:[%s3 + $0x8] sm:$0xf]
      %v1071 = vld [vmem:[%s3 + $0xc] sm:$0xf]
      %v1072 = vld [vmem:[%s3 + $0x10] sm:$0xf]
      %v1073 = vld [vmem:[%s4] sm:$0x1]
      %v1075 = vlaneseq
      %v1076 = vshrl.u32 %v1075, 7
      %v1077 = vsub.s32 0, %v1076
      %v1078 = vrot.slane %v1073, %v1077
      %v1085 = vunpack.c.l.b16 %v1068
      %v1086 = vunpack.c.l.b16 %v1069
      %v1087 = vunpack.c.l.b16 %v1070
      %v1088 = vunpack.c.l.b16 %v1071
      %v1089 = vunpack.c.l.b16 %v1072
      %v1090 = vpack.c.b16 %v1086, %v1085
      %v1091 = vpack.c.b16 %v1088, %v1087
      %v1092 = vpack.c.b16 %v1089, %v1089
      %v1096 = vsel %vm503, %v1092, 0
      %1098 = vmatprep.subr.bf16.mxu0 0
      %1099 = vmatpush1.bf16.msra.mxu0 0
      %1100 = vmatprep.subr.bf16.mxu0 0
      %1101 = vmatpush1.bf16.msra.mxu0 0
      %1102 = vmatprep.subr.bf16.mxu0 0
      %1103 = vmatpush1.bf16.msra.mxu0 0
      %1104 = vmatprep.subr.bf16.mxu0 0
      %1105 = vmatpush1.bf16.msra.mxu0 0
      %1106 = vmatprep.subr.bf16.mxu0 0
      %1107 = vmatpush1.bf16.msra.mxu0 0
      %1108 = vmatprep.subr.bf16.mxu0 0
      %1109 = vmatpush1.bf16.msra.mxu0 %v1096
      %1110 = vmatprep.subr.bf16.mxu0 0
      %1111 = vmatpush1.bf16.msra.mxu0 %v1091
      %1112 = vmatprep.subr.bf16.mxu0 0
      %1113 = vmatpush1.bf16.msra.mxu0 %v1090
      %1114 = vmatprep.subr.bf16.mxu0 0
      %1115 = vmatpush2.bf16.msra.mxu0 0
      %1116 = vmatprep.subr.bf16.mxu0 0
      %1117 = vmatpush2.bf16.msra.mxu0 0
      %1118 = vmatprep.subr.bf16.mxu0 0
      %1119 = vmatpush2.bf16.msra.mxu0 0
      %1120 = vmatprep.subr.bf16.mxu0 0
      %1121 = vmatpush2.bf16.msra.mxu0 0
      %1122 = vmatprep.subr.bf16.mxu0 0
      %1123 = vmatpush2.bf16.msra.mxu0 0
      %1124 = vmatprep.subr.bf16.mxu0 0
      %1125 = vmatpush2.bf16.msra.mxu0 0
      %1126 = vmatprep.subr.bf16.mxu0 0
      %1127 = vmatpush2.bf16.msra.mxu0 0
      %1128 = vmatprep.subr.bf16.mxu0 0
      %1129 = vmatpush2.bf16.msra.mxu0 0
      %1130 = vmatprep.mubr.bf16.mxu0 0
      %1131 = vmatmul.mubr.bf16.gmra.mxu0 %v480
      %v1132 = vpop.f32.mrf.mxu0
      %v1133 = vadd.f32 %v1078, %v1132
      %v1134 = vpop.f32.mrf.mxu0
      %v1135 = vpop.f32.mrf.mxu0
      %v1136 = vadd.f32 %v1078, %v1135
      %v1137 = vpop.f32.mrf.mxu0
      %1138 = vmatprep.mubr.bf16.mxu0 0
      %1139 = vmatmul.mubr.bf16.gmra.mxu0 %v483
      %v1140 = vpop.f32.mrf.mxu0
      %v1141 = vadd.f32 %v1078, %v1140
      %v1142 = vpop.f32.mrf.mxu0
      %v1143 = vpop.f32.mrf.mxu0
      %v1144 = vadd.f32 %v1078, %v1143
      %v1145 = vpop.f32.mrf.mxu0
      %1146 = vmatprep.mubr.bf16.mxu0 0
      %1147 = vmatmul.mubr.bf16.gmra.mxu0 %v486
      %v1148 = vpop.f32.mrf.mxu0
      %v1149 = vadd.f32 %v1078, %v1148
      %v1150 = vpop.f32.mrf.mxu0
      %v1151 = vpop.f32.mrf.mxu0
      %v1152 = vadd.f32 %v1078, %v1151
      %v1153 = vpop.f32.mrf.mxu0
      %1154 = vmatprep.mubr.bf16.mxu0 0
      %1155 = vmatmul.mubr.bf16.gmra.mxu0 %v489
      %v1156 = vpop.f32.mrf.mxu0
      %v1157 = vadd.f32 %v1078, %v1156
      %v1158 = vpop.f32.mrf.mxu0
      %v1159 = vpop.f32.mrf.mxu0
      %v1160 = vadd.f32 %v1078, %v1159
      %v1161 = vpop.f32.mrf.mxu0
      %1162 = vmatprep.mubr.bf16.mxu0 0
      %1163 = vmatmul.mubr.bf16.gmra.mxu0 %v492
      %v1164 = vpop.f32.mrf.mxu0
      %v1165 = vadd.f32 %v1078, %v1164
      %v1166 = vpop.f32.mrf.mxu0
      %v1167 = vpop.f32.mrf.mxu0
      %v1168 = vadd.f32 %v1078, %v1167
      %v1169 = vpop.f32.mrf.mxu0
      %1170 = vmatprep.mubr.bf16.mxu0 0
      %1171 = vmatmul.mubr.bf16.gmra.mxu0 %v495
      %v1172 = vpop.f32.mrf.mxu0
      %v1173 = vadd.f32 %v1078, %v1172
      %v1174 = vpop.f32.mrf.mxu0
      %v1175 = vpop.f32.mrf.mxu0
      %v1176 = vadd.f32 %v1078, %v1175
      %v1177 = vpop.f32.mrf.mxu0
      %1178 = vmatprep.mubr.bf16.mxu0 0
      %1179 = vmatmul.mubr.bf16.gmra.mxu0 %v498
      %v1180 = vpop.f32.mrf.mxu0
      %v1181 = vadd.f32 %v1078, %v1180
      %v1182 = vpop.f32.mrf.mxu0
      %v1183 = vpop.f32.mrf.mxu0
      %v1184 = vadd.f32 %v1078, %v1183
      %v1185 = vpop.f32.mrf.mxu0
      %1186 = vmatprep.mubr.bf16.mxu0 0
      %1187 = vmatmul.mubr.bf16.gmra.mxu0 %v501
      %v1188 = vpop.f32.mrf.mxu0
      %v1189 = vadd.f32 %v1078, %v1188
      %v1190 = vpop.f32.mrf.mxu0
      %v1191 = vpop.f32.mrf.mxu0
      %v1192 = vadd.f32 %v1078, %v1191
      %v1193 = vpop.f32.mrf.mxu0
      %1194 = vdwg.mxu0
      %v1195 = vmax.f32 %v1133, 0.0
      %v1196 = vmax.f32 %v1136, 0.0
      %v1197 = vmax.f32 %v1141, 0.0
      %v1198 = vmax.f32 %v1144, 0.0
      %v1199 = vmax.f32 %v1149, 0.0
      %v1200 = vmax.f32 %v1152, 0.0
      %v1201 = vmax.f32 %v1157, 0.0
      %v1202 = vmax.f32 %v1160, 0.0
      %v1203 = vmax.f32 %v1165, 0.0
      %v1204 = vmax.f32 %v1168, 0.0
      %v1205 = vmax.f32 %v1173, 0.0
      %v1206 = vmax.f32 %v1176, 0.0
      %v1207 = vmax.f32 %v1181, 0.0
      %v1208 = vmax.f32 %v1184, 0.0
      %v1209 = vmax.f32 %v1189, 0.0
      %v1210 = vmax.f32 %v1192, 0.0
      %v1211 = vld [vmem:[%s5] sm:$0xf]
      %v1212 = vld [vmem:[%s5 + $0x4] sm:$0xf]
      %v1213 = vld [vmem:[%s5 + $0x8] sm:$0xf]
      %v1214 = vld [vmem:[%s5 + $0xc] sm:$0xf]
      %v1215 = vpack.c.bf16 %v1196, %v1195
      %v1216 = vpack.c.bf16 %v1198, %v1197
      %v1217 = vpack.c.bf16 %v1200, %v1199
      %v1218 = vpack.c.bf16 %v1202, %v1201
      %v1219 = vpack.c.bf16 %v1204, %v1203
      %v1220 = vpack.c.bf16 %v1206, %v1205
      %v1221 = vpack.c.bf16 %v1208, %v1207
      %v1222 = vpack.c.bf16 %v1210, %v1209
      %v1223 = vld [vmem:[%s6] sm:$0x1]
      %v1225 = vlaneseq
      %v1226 = vshrl.u32 %v1225, 7
      %v1227 = vsub.s32 0, %v1226
      %v1228 = vrot.slane %v1223, %v1227
      %v1234 = vunpack.c.l.b16 %v1211
      %v1235 = vunpack.c.l.b16 %v1212
      %v1236 = vunpack.c.l.b16 %v1213
      %v1237 = vunpack.c.l.b16 %v1214
      %v1238 = vpack.c.b16 %v1235, %v1234
      %v1239 = vpack.c.b16 %v1237, %v1236
      %vm1242 = vcmask 261120
      %v1244 = vsel %vm1242, %v1215, 0
      %v1247 = vsel %vm1242, %v1216, 0
      %v1250 = vsel %vm1242, %v1217, 0
      %v1253 = vsel %vm1242, %v1218, 0
      %v1256 = vsel %vm1242, %v1219, 0
      %v1259 = vsel %vm1242, %v1220, 0
      %v1262 = vsel %vm1242, %v1221, 0
      %v1265 = vsel %vm1242, %v1222, 0
      %1267 = vmatprep.subr.bf16.mxu0 0
      %1268 = vmatpush1.bf16.msra.mxu0 0
      %1269 = vmatprep.subr.bf16.mxu0 0
      %1270 = vmatpush1.bf16.msra.mxu0 0
      %1271 = vmatprep.subr.bf16.mxu0 0
      %1272 = vmatpush1.bf16.msra.mxu0 0
      %1273 = vmatprep.subr.bf16.mxu0 0
      %1274 = vmatpush1.bf16.msra.mxu0 0
      %1275 = vmatprep.subr.bf16.mxu0 0
      %1276 = vmatpush1.bf16.msra.mxu0 0
      %1277 = vmatprep.subr.bf16.mxu0 0
      %1278 = vmatpush1.bf16.msra.mxu0 0
      %1279 = vmatprep.subr.bf16.mxu0 0
      %1280 = vmatpush1.bf16.msra.mxu0 %v1239
      %1281 = vmatprep.subr.bf16.mxu0 0
      %1282 = vmatpush1.bf16.msra.mxu0 %v1238
      %1283 = vmatprep.subr.bf16.mxu0 0
      %1284 = vmatpush2.bf16.msra.mxu0 0
      %1285 = vmatprep.subr.bf16.mxu0 0
      %1286 = vmatpush2.bf16.msra.mxu0 0
      %1287 = vmatprep.subr.bf16.mxu0 0
      %1288 = vmatpush2.bf16.msra.mxu0 0
      %1289 = vmatprep.subr.bf16.mxu0 0
      %1290 = vmatpush2.bf16.msra.mxu0 0
      %1291 = vmatprep.subr.bf16.mxu0 0
      %1292 = vmatpush2.bf16.msra.mxu0 0
      %1293 = vmatprep.subr.bf16.mxu0 0
      %1294 = vmatpush2.bf16.msra.mxu0 0
      %1295 = vmatprep.subr.bf16.mxu0 0
      %1296 = vmatpush2.bf16.msra.mxu0 0
      %1297 = vmatprep.subr.bf16.mxu0 0
      %1298 = vmatpush2.bf16.msra.mxu0 0
      %1299 = vmatprep.mubr.bf16.mxu0 0
      %1300 = vmatmul.mubr.bf16.gmra.mxu0 %v1244
      %v1301 = vpop.f32.mrf.mxu0
      %v1302 = vadd.f32 %v1228, %v1301
      %v1303 = vpop.f32.mrf.mxu0
      %v1304 = vpop.f32.mrf.mxu0
      %v1305 = vadd.f32 %v1228, %v1304
      %v1306 = vpop.f32.mrf.mxu0
      %1307 = vmatprep.mubr.bf16.mxu0 0
      %1308 = vmatmul.mubr.bf16.gmra.mxu0 %v1247
      %v1309 = vpop.f32.mrf.mxu0
      %v1310 = vadd.f32 %v1228, %v1309
      %v1311 = vpop.f32.mrf.mxu0
      %v1312 = vpop.f32.mrf.mxu0
      %v1313 = vadd.f32 %v1228, %v1312
      %v1314 = vpop.f32.mrf.mxu0
      %1315 = vmatprep.mubr.bf16.mxu0 0
      %1316 = vmatmul.mubr.bf16.gmra.mxu0 %v1250
      %v1317 = vpop.f32.mrf.mxu0
      %v1318 = vadd.f32 %v1228, %v1317
      %v1319 = vpop.f32.mrf.mxu0
      %v1320 = vpop.f32.mrf.mxu0
      %v1321 = vadd.f32 %v1228, %v1320
      %v1322 = vpop.f32.mrf.mxu0
      %1323 = vmatprep.mubr.bf16.mxu0 0
      %1324 = vmatmul.mubr.bf16.gmra.mxu0 %v1253
      %v1325 = vpop.f32.mrf.mxu0
      %v1326 = vadd.f32 %v1228, %v1325
      %v1327 = vpop.f32.mrf.mxu0
      %v1328 = vpop.f32.mrf.mxu0
      %v1329 = vadd.f32 %v1228, %v1328
      %v1330 = vpop.f32.mrf.mxu0
      %1331 = vmatprep.mubr.bf16.mxu0 0
      %1332 = vmatmul.mubr.bf16.gmra.mxu0 %v1256
      %v1333 = vpop.f32.mrf.mxu0
      %v1334 = vadd.f32 %v1228, %v1333
      %v1335 = vpop.f32.mrf.mxu0
      %v1336 = vpop.f32.mrf.mxu0
      %v1337 = vadd.f32 %v1228, %v1336
      %v1338 = vpop.f32.mrf.mxu0
      %1339 = vmatprep.mubr.bf16.mxu0 0
      %1340 = vmatmul.mubr.bf16.gmra.mxu0 %v1259
      %v1341 = vpop.f32.mrf.mxu0
      %v1342 = vadd.f32 %v1228, %v1341
      %v1343 = vpop.f32.mrf.mxu0
      %v1344 = vpop.f32.mrf.mxu0
      %v1345 = vadd.f32 %v1228, %v1344
      %v1346 = vpop.f32.mrf.mxu0
      %1347 = vmatprep.mubr.bf16.mxu0 0
      %1348 = vmatmul.mubr.bf16.gmra.mxu0 %v1262
      %v1349 = vpop.f32.mrf.mxu0
      %v1350 = vadd.f32 %v1228, %v1349
      %v1351 = vpop.f32.mrf.mxu0
      %v1352 = vpop.f32.mrf.mxu0
      %v1353 = vadd.f32 %v1228, %v1352
      %v1354 = vpop.f32.mrf.mxu0
      %1355 = vmatprep.mubr.bf16.mxu0 0
      %1356 = vmatmul.mubr.bf16.gmra.mxu0 %v1265
      %v1357 = vpop.f32.mrf.mxu0
      %v1358 = vadd.f32 %v1228, %v1357
      %v1359 = vpop.f32.mrf.mxu0
      %v1360 = vpop.f32.mrf.mxu0
      %v1361 = vadd.f32 %v1228, %v1360
      %v1362 = vpop.f32.mrf.mxu0
      %1363 = vdwg.mxu0
      %v1364 = vmax.f32 %v1302, 0.0
      %v1365 = vmax.f32 %v1305, 0.0
      %v1366 = vmax.f32 %v1310, 0.0
      %v1367 = vmax.f32 %v1313, 0.0
      %v1368 = vmax.f32 %v1318, 0.0
      %v1369 = vmax.f32 %v1321, 0.0
      %v1370 = vmax.f32 %v1326, 0.0
      %v1371 = vmax.f32 %v1329, 0.0
      %v1372 = vmax.f32 %v1334, 0.0
      %v1373 = vmax.f32 %v1337, 0.0
      %v1374 = vmax.f32 %v1342, 0.0
      %v1375 = vmax.f32 %v1345, 0.0
      %v1376 = vmax.f32 %v1350, 0.0
      %v1377 = vmax.f32 %v1353, 0.0
      %v1378 = vmax.f32 %v1358, 0.0
      %v1379 = vmax.f32 %v1361, 0.0
      %v1380 = vld [vmem:[%s7] sm:$0x1]
      %v1382 = vlaneseq
      %v1383 = vshrl.u32 %v1382, 7
      %v1384 = vsub.s32 0, %v1383
      %v1385 = vrot.slane %v1380, %v1384
      %v1387 = vmul.f32 %v1052, %v1385
      %v1388 = vmul.f32 %v1053, %v1385
      %v1389 = vmul.f32 %v1054, %v1385
      %v1390 = vmul.f32 %v1055, %v1385
      %v1391 = vmul.f32 %v1056, %v1385
      %v1392 = vmul.f32 %v1057, %v1385
      %v1393 = vmul.f32 %v1058, %v1385
      %v1394 = vmul.f32 %v1059, %v1385
      %v1395 = vmul.f32 %v1060, %v1385
      %v1396 = vmul.f32 %v1061, %v1385
      %v1397 = vmul.f32 %v1062, %v1385
      %v1398 = vmul.f32 %v1063, %v1385
      %v1399 = vmul.f32 %v1064, %v1385
      %v1400 = vmul.f32 %v1065, %v1385
      %v1401 = vmul.f32 %v1066, %v1385
      %v1402 = vmul.f32 %v1067, %v1385
      %v1403 = vsel %vm478, %v1387, 0.0
      %1404 = vadd.xlane.f32.xlu0 %v1403
      %v1405 = vpop.xlane.xlu0 %1404
      %v1406 = vsel %vm478, %v1388, 0.0
      %1407 = vadd.xlane.f32.xlu0 %v1406
      %v1408 = vpop.xlane.xlu0 %1407
      %v1409 = vsel %vm478, %v1389, 0.0
      %1410 = vadd.xlane.f32.xlu0 %v1409
      %v1411 = vpop.xlane.xlu0 %1410
      %v1412 = vsel %vm478, %v1390, 0.0
      %1413 = vadd.xlane.f32.xlu0 %v1412
      %v1414 = vpop.xlane.xlu0 %1413
      %v1415 = vsel %vm478, %v1391, 0.0
      %1416 = vadd.xlane.f32.xlu0 %v1415
      %v1417 = vpop.xlane.xlu0 %1416
      %v1418 = vsel %vm478, %v1392, 0.0
      %1419 = vadd.xlane.f32.xlu0 %v1418
      %v1420 = vpop.xlane.xlu0 %1419
      %v1421 = vsel %vm478, %v1393, 0.0
      %1422 = vadd.xlane.f32.xlu0 %v1421
      %v1423 = vpop.xlane.xlu0 %1422
      %v1424 = vsel %vm478, %v1394, 0.0
      %1425 = vadd.xlane.f32.xlu0 %v1424
      %v1426 = vpop.xlane.xlu0 %1425
      %v1427 = vsel %vm478, %v1395, 0.0
      %1428 = vadd.xlane.f32.xlu0 %v1427
      %v1429 = vpop.xlane.xlu0 %1428
      %v1430 = vsel %vm478, %v1396, 0.0
      %1431 = vadd.xlane.f32.xlu0 %v1430
      %v1432 = vpop.xlane.xlu0 %1431
      %v1433 = vsel %vm478, %v1397, 0.0
      %1434 = vadd.xlane.f32.xlu0 %v1433
      %v1435 = vpop.xlane.xlu0 %1434
      %v1436 = vsel %vm478, %v1398, 0.0
      %1437 = vadd.xlane.f32.xlu0 %v1436
      %v1438 = vpop.xlane.xlu0 %1437
      %v1439 = vsel %vm478, %v1399, 0.0
      %1440 = vadd.xlane.f32.xlu0 %v1439
      %v1441 = vpop.xlane.xlu0 %1440
      %v1442 = vsel %vm478, %v1400, 0.0
      %1443 = vadd.xlane.f32.xlu0 %v1442
      %v1444 = vpop.xlane.xlu0 %1443
      %v1445 = vsel %vm478, %v1401, 0.0
      %1446 = vadd.xlane.f32.xlu0 %v1445
      %v1447 = vpop.xlane.xlu0 %1446
      %v1448 = vsel %vm478, %v1402, 0.0
      %1449 = vadd.xlane.f32.xlu0 %v1448
      %v1450 = vpop.xlane.xlu0 %1449
      %v1451 = vld [vmem:[%s8] sm:$0x1]
      %v1453 = vlaneseq
      %v1454 = vshrl.u32 %v1453, 7
      %v1455 = vsub.s32 0, %v1454
      %v1456 = vrot.slane %v1451, %v1455
      %v1458 = vmul.f32 %v1364, %v1456
      %v1459 = vmul.f32 %v1365, %v1456
      %v1460 = vmul.f32 %v1366, %v1456
      %v1461 = vmul.f32 %v1367, %v1456
      %v1462 = vmul.f32 %v1368, %v1456
      %v1463 = vmul.f32 %v1369, %v1456
      %v1464 = vmul.f32 %v1370, %v1456
      %v1465 = vmul.f32 %v1371, %v1456
      %v1466 = vmul.f32 %v1372, %v1456
      %v1467 = vmul.f32 %v1373, %v1456
      %v1468 = vmul.f32 %v1374, %v1456
      %v1469 = vmul.f32 %v1375, %v1456
      %v1470 = vmul.f32 %v1376, %v1456
      %v1471 = vmul.f32 %v1377, %v1456
      %v1472 = vmul.f32 %v1378, %v1456
      %v1473 = vmul.f32 %v1379, %v1456
      %vm1474 = vcmask 130048
      %v1475 = vsel %vm1474, %v1458, 0.0
      %1476 = vadd.xlane.f32.xlu0 %v1475
      %v1477 = vpop.xlane.xlu0 %1476
      %v1478 = vsel %vm1474, %v1459, 0.0
      %1479 = vadd.xlane.f32.xlu0 %v1478
      %v1480 = vpop.xlane.xlu0 %1479
      %v1481 = vsel %vm1474, %v1460, 0.0
      %1482 = vadd.xlane.f32.xlu0 %v1481
      %v1483 = vpop.xlane.xlu0 %1482
      %v1484 = vsel %vm1474, %v1461, 0.0
      %1485 = vadd.xlane.f32.xlu0 %v1484
      %v1486 = vpop.xlane.xlu0 %1485
      %v1487 = vsel %vm1474, %v1462, 0.0
      %1488 = vadd.xlane.f32.xlu0 %v1487
      %v1489 = vpop.xlane.xlu0 %1488
      %v1490 = vsel %vm1474, %v1463, 0.0
      %1491 = vadd.xlane.f32.xlu0 %v1490
      %v1492 = vpop.xlane.xlu0 %1491
      %v1493 = vsel %vm1474, %v1464, 0.0
      %1494 = vadd.xlane.f32.xlu0 %v1493
      %v1495 = vpop.xlane.xlu0 %1494
      %v1496 = vsel %vm1474, %v1465, 0.0
      %1497 = vadd.xlane.f32.xlu0 %v1496
      %v1498 = vpop.xlane.xlu0 %1497
      %v1499 = vsel %vm1474, %v1466, 0.0
      %1500 = vadd.xlane.f32.xlu0 %v1499
      %v1501 = vpop.xlane.xlu0 %1500
      %v1502 = vsel %vm1474, %v1467, 0.0
      %1503 = vadd.xlane.f32.xlu0 %v1502
      %v1504 = vpop.xlane.xlu0 %1503
      %v1505 = vsel %vm1474, %v1468, 0.0
      %1506 = vadd.xlane.f32.xlu0 %v1505
      %v1507 = vpop.xlane.xlu0 %1506
      %v1508 = vsel %vm1474, %v1469, 0.0
      %1509 = vadd.xlane.f32.xlu0 %v1508
      %v1510 = vpop.xlane.xlu0 %1509
      %v1511 = vsel %vm1474, %v1470, 0.0
      %1512 = vadd.xlane.f32.xlu0 %v1511
      %v1513 = vpop.xlane.xlu0 %1512
      %v1514 = vsel %vm1474, %v1471, 0.0
      %1515 = vadd.xlane.f32.xlu0 %v1514
      %v1516 = vpop.xlane.xlu0 %1515
      %v1517 = vsel %vm1474, %v1472, 0.0
      %1518 = vadd.xlane.f32.xlu0 %v1517
      %v1519 = vpop.xlane.xlu0 %1518
      %v1520 = vsel %vm1474, %v1473, 0.0
      %1521 = vadd.xlane.f32.xlu0 %v1520
      %v1522 = vpop.xlane.xlu0 %1521
      %v1523 = vadd.f32 %v1405, %v1477
      %v1524 = vadd.f32 %v1408, %v1480
      %v1525 = vadd.f32 %v1411, %v1483
      %v1526 = vadd.f32 %v1414, %v1486
      %v1527 = vadd.f32 %v1417, %v1489
      %v1528 = vadd.f32 %v1420, %v1492
      %v1529 = vadd.f32 %v1423, %v1495
      %v1530 = vadd.f32 %v1426, %v1498
      %v1531 = vadd.f32 %v1429, %v1501
      %v1532 = vadd.f32 %v1432, %v1504
      %v1533 = vadd.f32 %v1435, %v1507
      %v1534 = vadd.f32 %v1438, %v1510
      %v1535 = vadd.f32 %v1441, %v1513
      %v1536 = vadd.f32 %v1444, %v1516
      %v1537 = vadd.f32 %v1447, %v1519
      %v1538 = vadd.f32 %v1450, %v1522
      %s1539 = sld [smem:[#allocation2]]
      %v1540 = vstv %s1539
      %v1541 = vadd.f32 %v1523, %v1540
      %v1542 = vadd.f32 %v1524, %v1540
      %v1543 = vadd.f32 %v1525, %v1540
      %v1544 = vadd.f32 %v1526, %v1540
      %v1545 = vadd.f32 %v1527, %v1540
      %v1546 = vadd.f32 %v1528, %v1540
      %v1547 = vadd.f32 %v1529, %v1540
      %v1548 = vadd.f32 %v1530, %v1540
      %v1549 = vadd.f32 %v1531, %v1540
      %v1550 = vadd.f32 %v1532, %v1540
      %v1551 = vadd.f32 %v1533, %v1540
      %v1552 = vadd.f32 %v1534, %v1540
      %v1553 = vadd.f32 %v1535, %v1540
      %v1554 = vadd.f32 %v1536, %v1540
      %v1555 = vadd.f32 %v1537, %v1540
      %v1556 = vadd.f32 %v1538, %v1540
      %v1557 = vsub.f32 0.0, %v1541
      %v1558 = vsub.f32 0.0, %v1542
      %v1559 = vsub.f32 0.0, %v1543
      %v1560 = vsub.f32 0.0, %v1544
      %v1561 = vsub.f32 0.0, %v1545
      %v1562 = vsub.f32 0.0, %v1546
      %v1563 = vsub.f32 0.0, %v1547
      %v1564 = vsub.f32 0.0, %v1548
      %v1565 = vsub.f32 0.0, %v1549
      %v1566 = vsub.f32 0.0, %v1550
      %v1567 = vsub.f32 0.0, %v1551
      %v1568 = vsub.f32 0.0, %v1552
      %v1569 = vsub.f32 0.0, %v1553
      %v1570 = vsub.f32 0.0, %v1554
      %v1571 = vsub.f32 0.0, %v1555
      %v1572 = vsub.f32 0.0, %v1556
      %v1573 = vmul.f32 %v1557, 1.442695
      %v1574 = vpow.pop %v1573
      %v1575 = vmul.f32 %v1558, 1.442695
      %v1576 = vpow.pop %v1575
      %v1577 = vmul.f32 %v1559, 1.442695
      %v1578 = vpow.pop %v1577
      %v1579 = vmul.f32 %v1560, 1.442695
      %v1580 = vpow.pop %v1579
      %v1581 = vmul.f32 %v1561, 1.442695
      %v1582 = vpow.pop %v1581
      %v1583 = vmul.f32 %v1562, 1.442695
      %v1584 = vpow.pop %v1583
      %v1585 = vmul.f32 %v1563, 1.442695
      %v1586 = vpow.pop %v1585
      %v1587 = vmul.f32 %v1564, 1.442695
      %v1588 = vpow.pop %v1587
      %v1589 = vmul.f32 %v1565, 1.442695
      %v1590 = vpow.pop %v1589
      %v1591 = vmul.f32 %v1566, 1.442695
      %v1592 = vpow.pop %v1591
      %v1593 = vmul.f32 %v1567, 1.442695
      %v1594 = vpow.pop %v1593
      %v1595 = vmul.f32 %v1568, 1.442695
      %v1596 = vpow.pop %v1595
      %v1597 = vmul.f32 %v1569, 1.442695
      %v1598 = vpow.pop %v1597
      %v1599 = vmul.f32 %v1570, 1.442695
      %v1600 = vpow.pop %v1599
      %v1601 = vmul.f32 %v1571, 1.442695
      %v1602 = vpow.pop %v1601
      %v1603 = vmul.f32 %v1572, 1.442695
      %v1604 = vpow.pop %v1603
      %v1605 = vadd.f32 %v1574, 1.0
      %v1606 = vadd.f32 %v1576, 1.0
      %v1607 = vadd.f32 %v1578, 1.0
      %v1608 = vadd.f32 %v1580, 1.0
      %v1609 = vadd.f32 %v1582, 1.0
      %v1610 = vadd.f32 %v1584, 1.0
      %v1611 = vadd.f32 %v1586, 1.0
      %v1612 = vadd.f32 %v1588, 1.0
      %v1613 = vadd.f32 %v1590, 1.0
      %v1614 = vadd.f32 %v1592, 1.0
      %v1615 = vadd.f32 %v1594, 1.0
      %v1616 = vadd.f32 %v1596, 1.0
      %v1617 = vadd.f32 %v1598, 1.0
      %v1618 = vadd.f32 %v1600, 1.0
      %v1619 = vadd.f32 %v1602, 1.0
      %v1620 = vadd.f32 %v1604, 1.0
      %v1621 = vrcp.pop %v1605
      %v1622 = vrcp.pop %v1606
      %v1623 = vrcp.pop %v1607
      %v1624 = vrcp.pop %v1608
      %v1625 = vrcp.pop %v1609
      %v1626 = vrcp.pop %v1610
      %v1627 = vrcp.pop %v1611
      %v1628 = vrcp.pop %v1612
      %v1629 = vrcp.pop %v1613
      %v1630 = vrcp.pop %v1614
      %v1631 = vrcp.pop %v1615
      %v1632 = vrcp.pop %v1616
      %v1633 = vrcp.pop %v1617
      %v1634 = vrcp.pop %v1618
      %v1635 = vrcp.pop %v1619
      %v1636 = vrcp.pop %v1620
      %vm1637 = vcmask 7168
      %1638 = vst.msk [vmem:[%s382] sm:$0xff] %vm1637, %v1621
      %1639 = vst.msk [vmem:[%s382 + $0x8] sm:$0xff] %vm1637, %v1622
      %1640 = vst.msk [vmem:[%s382 + $0x10] sm:$0xff] %vm1637, %v1623
      %1641 = vst.msk [vmem:[%s382 + $0x18] sm:$0xff] %vm1637, %v1624
      %1642 = vst.msk [vmem:[%s382 + $0x20] sm:$0xff] %vm1637, %v1625
      %1643 = vst.msk [vmem:[%s382 + $0x28] sm:$0xff] %vm1637, %v1626
      %1644 = vst.msk [vmem:[%s382 + $0x30] sm:$0xff] %vm1637, %v1627
      %1645 = vst.msk [vmem:[%s382 + $0x38] sm:$0xff] %vm1637, %v1628
      %1646 = vst.msk [vmem:[%s382 + $0x40] sm:$0xff] %vm1637, %v1629
      %1647 = vst.msk [vmem:[%s382 + $0x48] sm:$0xff] %vm1637, %v1630
      %1648 = vst.msk [vmem:[%s382 + $0x50] sm:$0xff] %vm1637, %v1631
      %1649 = vst.msk [vmem:[%s382 + $0x58] sm:$0xff] %vm1637, %v1632
      %1650 = vst.msk [vmem:[%s382 + $0x60] sm:$0xff] %vm1637, %v1633
      %1651 = vst.msk [vmem:[%s382 + $0x68] sm:$0xff] %vm1637, %v1634
      %1652 = vst.msk [vmem:[%s382 + $0x70] sm:$0xff] %vm1637, %v1635
      %1653 = vst.msk [vmem:[%s382 + $0x78] sm:$0xff] %vm1637, %v1636
      %s1654 = smul.u32 16, %s22
      %p1655 = scmp.lt.s32.totalorder %s1654, 47
      %s1656 = scalar_select %p1655, %s1654, 47
      %s1657 = smul.addr %s1656, 8
      %s1658 = scalar_lea.vmem %s10, %s1657
      // Predicated region
      $region61: #{tpu_custom_call.1} parent=59 // pred_check
        %p1659 = pneg %p255
      $region62: #{tpu_custom_call.1} parent=59 // pred_check_branch
        %1661 = sbr.rel (%p1659) target = $region64
      $region63: #{tpu_custom_call.1} parent=59 // pred_region
        %s1662 = smul.u32 16, %s22
      $region64: #{tpu_custom_call.1} parent=59 // pred_fallthru
        _
    $region60: #{tpu_custom_call.1} parent=5 // pred_fallthru
      _
    %p1663 = scmp.le.s32.totalorder 2, %s17
    // Predicated region
    $region65: #{tpu_custom_call.1} parent=5 // pred_check
      %p1664 = pneg %p1663
    $region66: #{tpu_custom_call.1} parent=5 // pred_check_branch
      %1666 = sbr.rel (%p1664) target = $region68
    $region67: #{tpu_custom_call.1} parent=5 // pred_region
      %s1667 = ssub.s32 %s17, 2
      // Predicated region
      $region69: #{tpu_custom_call.1} parent=67 // pred_check
        %p1668 = pneg %p261
      $region70: #{tpu_custom_call.1} parent=67 // pred_check_branch
        %1670 = sbr.rel (%p1668) target = $region72
      $region71: #{tpu_custom_call.1} parent=67 // pred_region
        %s1671 = smul.u32 16, %s23
        %p1672 = scmp.lt.s32.totalorder %s1671, 47
        %s1673 = scalar_select %p1672, %s1671, 47
        %s1674 = smul.addr %s1673, 8
        %s1675 = scalar_lea.vmem %s10, %s1674
      $region72: #{tpu_custom_call.1} parent=67 // pred_fallthru
        _
    $region68: #{tpu_custom_call.1} parent=5 // pred_fallthru
      _
  $region6: #{tpu_custom_call.1} parent=0 // loop_footer
    %s21 = sadd.s32 1, %s17
  $region7: #{tpu_custom_call.1} parent=0 // loop_footer_branch
    %16 = sbr.rel target = $region3
  $region8: #{tpu_custom_call.1} parent=0 // loop_exit
    _

</llo_original>
